<compile_context>
chip_gen: v6e
topology: v6e:2x2x1
jax: 0.10.0
libtpu: 0.0.40
codegen_flags: <defaults>
</compile_context>

<pallas_src>
import jax
import jax.numpy as jnp
from jax.experimental import pallas as pl
from jax.experimental.pallas import tpu as pltpu


def make_forward(Bp, E, L, H, NC):
    H2, H6, H8 = 2 * H, 6 * H, 8 * H
    K = 6 * E

    def kernel(slab_ref, wfused_ref, bfused_ref, whh_ref,
               h0_ref, c0_ref, wout_ref, bout_ref, out_ref):
        # ONE fused matmul yields the *merged* fwd/bwd input-to-hidden gate
        # preactivations for every time step.  Row block t (Bp rows, sublane
        # aligned) already holds [fwd gates @ time t | bwd gates @ time L-1-t]
        # in its interleaved H-blocks, because the wrapper feeds time-reversed
        # im2col rows into the bwd half of the doubled-K slab.
        gates = jnp.dot(slab_ref[...], wfused_ref[...],
                        preferred_element_type=jnp.float32) + bfused_ref[...]

        whh = whh_ref[...]                      # (2H, 8H) block-diagonal
        h = h0_ref[...]                         # (Bp, 2H) = [h_f | h_b]
        c = c0_ref[...]                         # (Bp, 2H) = [c_f | c_b]
        hsum = jnp.zeros((Bp, H2), jnp.float32)

        # Fused fwd/bwd recurrence, fully unrolled (L is small & static).
        # Every slice below is static and starts on a sublane boundary
        # (Bp == 8 rows per time step).
        for t in range(L):
            g = gates[t * Bp:(t + 1) * Bp, :] + jnp.dot(
                h, whh, preferred_element_type=jnp.float32)
            sg = jax.nn.sigmoid(g[:, 0:H6])     # [i_f,i_b,f_f,f_b,o_f,o_b]
            tg = jnp.tanh(g[:, H6:H8])          # [g_f, g_b]
            i_g = sg[:, 0:H2]
            f_g = sg[:, H2:2 * H2]
            o_g = sg[:, 2 * H2:3 * H2]
            c = f_g * c + i_g * tg
            h = o_g * jnp.tanh(c)
            hsum = hsum + h

        # Attention: softmax over a size-1 axis is identically 1.0, so the
        # pooled vector is exactly the sum of LSTM outputs over time.
        logits = jnp.dot(hsum, wout_ref[...],
                         preferred_element_type=jnp.float32) + bout_ref[...]
        m = jnp.max(logits, axis=-1, keepdims=True)
        z = logits - m
        lse = jnp.log(jnp.sum(jnp.exp(z), axis=-1, keepdims=True))
        out_ref[...] = (z - lse).astype(out_ref.dtype)

    in_specs = [
        pl.BlockSpec((L * Bp, K), lambda i: (0, 0)),    # merged im2col slab
        pl.BlockSpec((K, H8), lambda i: (0, 0)),        # fused conv+ih weight
        pl.BlockSpec((1, H8), lambda i: (0, 0)),        # fused bias
        pl.BlockSpec((H2, H8), lambda i: (0, 0)),       # W_hh, block-diagonal
        pl.BlockSpec((Bp, H2), lambda i: (0, 0)),       # h0 = [h0_f | h0_b]
        pl.BlockSpec((Bp, H2), lambda i: (0, 0)),       # c0 = [c0_f | c0_b]
        pl.BlockSpec((H2, NC), lambda i: (0, 0)),       # out W^T
        pl.BlockSpec((1, NC), lambda i: (0, 0)),        # out bias
    ]

    return pl.pallas_call(
        kernel,
        out_shape=jax.ShapeDtypeStruct((Bp, NC), jnp.float32),
        grid=(1,),
        in_specs=in_specs,
        out_specs=pl.BlockSpec((Bp, NC), lambda i: (0, 0)),
        compiler_params=pltpu.CompilerParams(
            dimension_semantics=("arbitrary",)),
    )


def cnn_lstm_attention(x, params, h0, c0):
    """x: (B, E, L) like the PyTorch module; returns (B, out_classes) log-probs."""
    B, E, L = x.shape
    C = params["conv_w"].shape[0]
    H = params["w_hh_f"].shape[1]
    NC = params["out_w"].shape[0]
    Bp = ((B + 7) // 8) * 8            # pad batch to the f32 sublane tile (8)

    # ---- plain-JAX glue: layout prep only (pads / transposes / concats) ----
    # im2col, time-major: row (t, b), column (k*E + e) = x_pad[b, e, t + k]
    xp = jnp.pad(jnp.transpose(x, (2, 0, 1)), ((1, 1), (0, 0), (0, 0)))  # (L+2, B, E)
    cols = jnp.concatenate([xp[k:k + L] for k in range(3)], axis=-1)     # (L, B, 3E)
    cols = jnp.pad(cols, ((0, 0), (0, Bp - B), (0, 0)))                  # (L, Bp, 3E)
    # Doubled-K slab: first 3E columns = time t rows (fwd direction),
    # last 3E columns = time L-1-t rows (bwd direction), already merged.
    slab = jnp.concatenate([cols, cols[::-1]], axis=-1).reshape(L * Bp, 6 * E)

    wc = jnp.transpose(params["conv_w"], (2, 1, 0)).reshape(3 * E, C)    # (3E, C)
    bc = params["conv_b"].reshape(1, C)

    # Interleaved gate-column layout: [i_f, i_b, f_f, f_b, o_f, o_b, g_f, g_b]
    def ifog(w_t):  # w_t: (rows, 4H), PyTorch column order [i, f, g, o]
        return (w_t[:, 0:H], w_t[:, H:2 * H],
                w_t[:, 3 * H:4 * H], w_t[:, 2 * H:3 * H])   # -> i, f, o, g

    fi, ff, fo, fg = ifog(params["w_ih_f"].T)               # (C, H) each
    bi, bf_, bo, bg = ifog(params["w_ih_b"].T)
    wih = jnp.concatenate([fi, bi, ff, bf_, fo, bo, fg, bg], axis=1)     # (C, 8H)

    # Fold Conv1d into the gate matmul (no activation is applied in forward()):
    w_big = wc @ wih                                        # (3E, 8H)
    fwd_mask = (((jnp.arange(8 * H) // H) % 2) == 0).astype(jnp.float32)[None, :]
    wfused = jnp.concatenate([w_big * fwd_mask,             # rows 0:3E -> fwd cols
                              w_big * (1.0 - fwd_mask)],    # rows 3E:6E -> bwd cols
                             axis=0)                        # (6E, 8H)

    hfi, hff, hfo, hfg = ifog(params["w_hh_f"].T)           # (H, H) each
    hbi, hbf, hbo, hbg = ifog(params["w_hh_b"].T)
    zH = jnp.zeros((H, H), jnp.float32)
    whh = jnp.concatenate([
        jnp.concatenate([hfi, zH, hff, zH, hfo, zH, hfg, zH], axis=1),
        jnp.concatenate([zH, hbi, zH, hbf, zH, hbo, zH, hbg], axis=1)],
        axis=0)                                             # (2H, 8H)

    cfi, cff, cfo, cfg = ifog((params["b_ih_f"] + params["b_hh_f"]).reshape(1, 4 * H))
    cbi, cbf, cbo, cbg = ifog((params["b_ih_b"] + params["b_hh_b"]).reshape(1, 4 * H))
    blstm = jnp.concatenate([cfi, cbi, cff, cbf, cfo, cbo, cfg, cbg], axis=1)
    bfused = bc @ wih + blstm                               # (1, 8H)

    h0c = jnp.pad(jnp.concatenate([h0[0], h0[1]], axis=1), ((0, Bp - B), (0, 0)))
    c0c = jnp.pad(jnp.concatenate([c0[0], c0[1]], axis=1), ((0, Bp - B), (0, 0)))

    wout = params["out_w"].T                                # (2H, NC)
    bout = params["out_b"].reshape(1, NC)
    # att_w / att_b are intentionally not passed: softmax over a size-1 axis is
    # identically 1, so they cannot affect the output (matches the module).

    fwd = make_forward(Bp, E, L, H, NC)
    out = fwd(slab, wfused, bfused, whh, h0c, c0c, wout, bout)
    return out[:B]


def reference_forward(x, params, h0, c0):
    """Pure-JAX mirror of the PyTorch forward (for verification)."""
    B, E, L = x.shape
    H = params["w_hh_f"].shape[1]
    xp = jnp.pad(x, ((0, 0), (0, 0), (1, 1)))
    conv = params["conv_b"][None, :, None] + sum(
        jnp.einsum('ce,bel->bcl', params["conv_w"][:, :, k], xp[:, :, k:k + L])
        for k in range(3))
    seq_in = jnp.transpose(conv, (2, 0, 1))                 # (L, B, C)

    def cell(x_t, h, c, w_ih, w_hh, b_ih, b_hh):
        g = x_t @ w_ih.T + b_ih + h @ w_hh.T + b_hh
        i = jax.nn.sigmoid(g[:, 0:H]); f = jax.nn.sigmoid(g[:, H:2 * H])
        gg = jnp.tanh(g[:, 2 * H:3 * H]); o = jax.nn.sigmoid(g[:, 3 * H:4 * H])
        c = f * c + i * gg
        h = o * jnp.tanh(c)
        return h, c

    h, c = h0[0], c0[0]
    fwd_states = []
    for t in range(L):
        h, c = cell(seq_in[t], h, c, params["w_ih_f"], params["w_hh_f"],
                    params["b_ih_f"], params["b_hh_f"])
        fwd_states.append(h)
    h, c = h0[1], c0[1]
    bwd_states = [None] * L
    for t in range(L - 1, -1, -1):
        h, c = cell(seq_in[t], h, c, params["w_ih_b"], params["w_hh_b"],
                    params["b_ih_b"], params["b_hh_b"])
        bwd_states[t] = h
    seq = jnp.stack([jnp.concatenate([fwd_states[t], bwd_states[t]], axis=-1)
                     for t in range(L)], axis=0)            # (L, B, 2H)
    att = seq @ params["att_w"].T + params["att_b"]         # (L, B, 1)
    att_norm = jax.nn.softmax(att, axis=2)
    pooled = jnp.sum(seq * att_norm, axis=0)                # (B, 2H)
    logits = pooled @ params["out_w"].T + params["out_b"]
    return jax.nn.log_softmax(logits, axis=1)


if __name__ == "__main__":
    B, E, L, C, H, NC = 2, 16, 16, 64, 32, 2
    key = jax.random.PRNGKey(0)
    ks = jax.random.split(key, 18)
    s = 0.1

    params = {
        "conv_w": s * jax.random.normal(ks[0], (C, E, 3), jnp.float32),
        "conv_b": s * jax.random.normal(ks[1], (C,), jnp.float32),
        "w_ih_f": s * jax.random.normal(ks[2], (4 * H, C), jnp.float32),
        "w_hh_f": s * jax.random.normal(ks[3], (4 * H, H), jnp.float32),
        "b_ih_f": s * jax.random.normal(ks[4], (4 * H,), jnp.float32),
        "b_hh_f": s * jax.random.normal(ks[5], (4 * H,), jnp.float32),
        "w_ih_b": s * jax.random.normal(ks[6], (4 * H, C), jnp.float32),
        "w_hh_b": s * jax.random.normal(ks[7], (4 * H, H), jnp.float32),
        "b_ih_b": s * jax.random.normal(ks[8], (4 * H,), jnp.float32),
        "b_hh_b": s * jax.random.normal(ks[9], (4 * H,), jnp.float32),
        "att_w": s * jax.random.normal(ks[10], (1, 2 * H), jnp.float32),
        "att_b": s * jax.random.normal(ks[11], (1,), jnp.float32),
        "out_w": s * jax.random.normal(ks[12], (NC, 2 * H), jnp.float32),
        "out_b": s * jax.random.normal(ks[13], (NC,), jnp.float32),
    }
    x = jax.random.normal(ks[14], (B, E, L), jnp.float32)
    # make_hidden() uses torch.randn; generate the initial state deterministically.
    h0 = s * jax.random.normal(ks[15], (2, B, H), jnp.float32)
    c0 = s * jax.random.normal(ks[16], (2, B, H), jnp.float32)

    out = jax.block_until_ready(cnn_lstm_attention(x, params, h0, c0))
    ref = reference_forward(x, params, h0, c0)

    assert out.shape == (B, NC)
    assert jnp.allclose(out, ref, atol=2e-3, rtol=2e-3), (out, ref)
    print("KERNEL_OK")
</pallas_src>

<mosaic_0001>
module attributes {stable_mosaic.version = 11 : i64} {
  func.func @kernel(%arg0: i32, %arg1: memref<128x96xf32, #tpu.memory_space<vmem>>, %arg2: memref<96x256xf32, #tpu.memory_space<vmem>>, %arg3: memref<1x256xf32, #tpu.memory_space<vmem>>, %arg4: memref<64x256xf32, #tpu.memory_space<vmem>>, %arg5: memref<8x64xf32, #tpu.memory_space<vmem>>, %arg6: memref<8x64xf32, #tpu.memory_space<vmem>>, %arg7: memref<64x2xf32, #tpu.memory_space<vmem>>, %arg8: memref<1x2xf32, #tpu.memory_space<vmem>>, %arg9: memref<8x2xf32, #tpu.memory_space<vmem>>) attributes {dimension_semantics = [#tpu.dimension_semantics<arbitrary>], iteration_bounds = array<i64: 1>, scalar_prefetch = 0 : i64, scratch_operands = 0 : i64, tpu.core_type = #tpu.core_type<tc>, window_params = [{pipeline_mode = #tpu.pipeline_mode<synchronous>, transform_indices = @transform_0, window_bounds = array<i64: 128, 96>}, {pipeline_mode = #tpu.pipeline_mode<synchronous>, transform_indices = @transform_1, window_bounds = array<i64: 96, 256>}, {pipeline_mode = #tpu.pipeline_mode<synchronous>, transform_indices = @transform_2, window_bounds = array<i64: 1, 256>}, {pipeline_mode = #tpu.pipeline_mode<synchronous>, transform_indices = @transform_3, window_bounds = array<i64: 64, 256>}, {pipeline_mode = #tpu.pipeline_mode<synchronous>, transform_indices = @transform_4, window_bounds = array<i64: 8, 64>}, {pipeline_mode = #tpu.pipeline_mode<synchronous>, transform_indices = @transform_5, window_bounds = array<i64: 8, 64>}, {pipeline_mode = #tpu.pipeline_mode<synchronous>, transform_indices = @transform_6, window_bounds = array<i64: 64, 2>}, {pipeline_mode = #tpu.pipeline_mode<synchronous>, transform_indices = @transform_7, window_bounds = array<i64: 1, 2>}, {pipeline_mode = #tpu.pipeline_mode<synchronous>, transform_indices = @transform_8, window_bounds = array<i64: 8, 2>}]} {
    %c0 = arith.constant 0 : index
    %c0_0 = arith.constant 0 : index
    %0 = vector.load %arg1[%c0, %c0_0] : memref<128x96xf32, #tpu.memory_space<vmem>>, vector<128x96xf32>
    %c0_1 = arith.constant 0 : index
    %c0_2 = arith.constant 0 : index
    %1 = vector.load %arg2[%c0_1, %c0_2] : memref<96x256xf32, #tpu.memory_space<vmem>>, vector<96x256xf32>
    %cst = arith.constant dense<0.000000e+00> : vector<128x256xf32>
    %2 = tpu.matmul %0, %1, %cst {dimension_numbers = #tpu.dot_dimension_numbers<[1], [0], [0], [1], [0, 0, 1, 1], [], []>} : vector<128x96xf32>, vector<96x256xf32>, vector<128x256xf32> -> vector<128x256xf32>
    %c0_3 = arith.constant 0 : index
    %c0_4 = arith.constant 0 : index
    %3 = vector.load %arg3[%c0_3, %c0_4] : memref<1x256xf32, #tpu.memory_space<vmem>>, vector<1x256xf32>
    %4 = vector.broadcast %3 : vector<1x256xf32> to vector<128x256xf32>
    %5 = arith.addf %2, %4 : vector<128x256xf32>
    %c0_5 = arith.constant 0 : index
    %c0_6 = arith.constant 0 : index
    %6 = vector.load %arg4[%c0_5, %c0_6] : memref<64x256xf32, #tpu.memory_space<vmem>>, vector<64x256xf32>
    %c0_7 = arith.constant 0 : index
    %c0_8 = arith.constant 0 : index
    %7 = vector.load %arg5[%c0_7, %c0_8] : memref<8x64xf32, #tpu.memory_space<vmem>>, vector<8x64xf32>
    %c0_9 = arith.constant 0 : index
    %c0_10 = arith.constant 0 : index
    %8 = vector.load %arg6[%c0_9, %c0_10] : memref<8x64xf32, #tpu.memory_space<vmem>>, vector<8x64xf32>
    %cst_11 = arith.constant 0.000000e+00 : f32
    %9 = vector.broadcast %cst_11 : f32 to vector<8x64xf32>
    %10 = vector.extract_strided_slice %5 {offsets = [0, 0], sizes = [8, 256], strides = [1, 1]} : vector<128x256xf32> to vector<8x256xf32>
    %cst_12 = arith.constant dense<0.000000e+00> : vector<8x256xf32>
    %11 = tpu.matmul %7, %6, %cst_12 {dimension_numbers = #tpu.dot_dimension_numbers<[1], [0], [0], [1], [0, 0, 1, 1], [], []>} : vector<8x64xf32>, vector<64x256xf32>, vector<8x256xf32> -> vector<8x256xf32>
    %12 = arith.addf %10, %11 : vector<8x256xf32>
    %13 = vector.extract_strided_slice %12 {offsets = [0, 0], sizes = [8, 192], strides = [1, 1]} : vector<8x256xf32> to vector<8x192xf32>
    %14 = arith.negf %13 : vector<8x192xf32>
    %15 = math.exp %14 : vector<8x192xf32>
    %cst_13 = arith.constant 1.000000e+00 : f32
    %16 = vector.broadcast %cst_13 : f32 to vector<8x192xf32>
    %17 = arith.addf %16, %15 : vector<8x192xf32>
    %18 = arith.divf %16, %17 : vector<8x192xf32>
    %19 = vector.extract_strided_slice %12 {offsets = [0, 192], sizes = [8, 64], strides = [1, 1]} : vector<8x256xf32> to vector<8x64xf32>
    %20 = math.tanh %19 : vector<8x64xf32>
    %21 = vector.extract_strided_slice %18 {offsets = [0, 0], sizes = [8, 64], strides = [1, 1]} : vector<8x192xf32> to vector<8x64xf32>
    %22 = vector.extract_strided_slice %18 {offsets = [0, 64], sizes = [8, 64], strides = [1, 1]} : vector<8x192xf32> to vector<8x64xf32>
    %23 = vector.extract_strided_slice %18 {offsets = [0, 128], sizes = [8, 64], strides = [1, 1]} : vector<8x192xf32> to vector<8x64xf32>
    %24 = arith.mulf %22, %8 : vector<8x64xf32>
    %25 = arith.mulf %21, %20 : vector<8x64xf32>
    %26 = arith.addf %24, %25 : vector<8x64xf32>
    %27 = math.tanh %26 : vector<8x64xf32>
    %28 = arith.mulf %23, %27 : vector<8x64xf32>
    %29 = arith.addf %9, %28 : vector<8x64xf32>
    %30 = vector.extract_strided_slice %5 {offsets = [8, 0], sizes = [8, 256], strides = [1, 1]} : vector<128x256xf32> to vector<8x256xf32>
    %cst_14 = arith.constant dense<0.000000e+00> : vector<8x256xf32>
    %31 = tpu.matmul %28, %6, %cst_14 {dimension_numbers = #tpu.dot_dimension_numbers<[1], [0], [0], [1], [0, 0, 1, 1], [], []>} : vector<8x64xf32>, vector<64x256xf32>, vector<8x256xf32> -> vector<8x256xf32>
    %32 = arith.addf %30, %31 : vector<8x256xf32>
    %33 = vector.extract_strided_slice %32 {offsets = [0, 0], sizes = [8, 192], strides = [1, 1]} : vector<8x256xf32> to vector<8x192xf32>
    %34 = arith.negf %33 : vector<8x192xf32>
    %35 = math.exp %34 : vector<8x192xf32>
    %cst_15 = arith.constant 1.000000e+00 : f32
    %36 = vector.broadcast %cst_15 : f32 to vector<8x192xf32>
    %37 = arith.addf %36, %35 : vector<8x192xf32>
    %38 = arith.divf %36, %37 : vector<8x192xf32>
    %39 = vector.extract_strided_slice %32 {offsets = [0, 192], sizes = [8, 64], strides = [1, 1]} : vector<8x256xf32> to vector<8x64xf32>
    %40 = math.tanh %39 : vector<8x64xf32>
    %41 = vector.extract_strided_slice %38 {offsets = [0, 0], sizes = [8, 64], strides = [1, 1]} : vector<8x192xf32> to vector<8x64xf32>
    %42 = vector.extract_strided_slice %38 {offsets = [0, 64], sizes = [8, 64], strides = [1, 1]} : vector<8x192xf32> to vector<8x64xf32>
    %43 = vector.extract_strided_slice %38 {offsets = [0, 128], sizes = [8, 64], strides = [1, 1]} : vector<8x192xf32> to vector<8x64xf32>
    %44 = arith.mulf %42, %26 : vector<8x64xf32>
    %45 = arith.mulf %41, %40 : vector<8x64xf32>
    %46 = arith.addf %44, %45 : vector<8x64xf32>
    %47 = math.tanh %46 : vector<8x64xf32>
    %48 = arith.mulf %43, %47 : vector<8x64xf32>
    %49 = arith.addf %29, %48 : vector<8x64xf32>
    %50 = vector.extract_strided_slice %5 {offsets = [16, 0], sizes = [8, 256], strides = [1, 1]} : vector<128x256xf32> to vector<8x256xf32>
    %cst_16 = arith.constant dense<0.000000e+00> : vector<8x256xf32>
    %51 = tpu.matmul %48, %6, %cst_16 {dimension_numbers = #tpu.dot_dimension_numbers<[1], [0], [0], [1], [0, 0, 1, 1], [], []>} : vector<8x64xf32>, vector<64x256xf32>, vector<8x256xf32> -> vector<8x256xf32>
    %52 = arith.addf %50, %51 : vector<8x256xf32>
    %53 = vector.extract_strided_slice %52 {offsets = [0, 0], sizes = [8, 192], strides = [1, 1]} : vector<8x256xf32> to vector<8x192xf32>
    %54 = arith.negf %53 : vector<8x192xf32>
    %55 = math.exp %54 : vector<8x192xf32>
    %cst_17 = arith.constant 1.000000e+00 : f32
    %56 = vector.broadcast %cst_17 : f32 to vector<8x192xf32>
    %57 = arith.addf %56, %55 : vector<8x192xf32>
    %58 = arith.divf %56, %57 : vector<8x192xf32>
    %59 = vector.extract_strided_slice %52 {offsets = [0, 192], sizes = [8, 64], strides = [1, 1]} : vector<8x256xf32> to vector<8x64xf32>
    %60 = math.tanh %59 : vector<8x64xf32>
    %61 = vector.extract_strided_slice %58 {offsets = [0, 0], sizes = [8, 64], strides = [1, 1]} : vector<8x192xf32> to vector<8x64xf32>
    %62 = vector.extract_strided_slice %58 {offsets = [0, 64], sizes = [8, 64], strides = [1, 1]} : vector<8x192xf32> to vector<8x64xf32>
    %63 = vector.extract_strided_slice %58 {offsets = [0, 128], sizes = [8, 64], strides = [1, 1]} : vector<8x192xf32> to vector<8x64xf32>
    %64 = arith.mulf %62, %46 : vector<8x64xf32>
    %65 = arith.mulf %61, %60 : vector<8x64xf32>
    %66 = arith.addf %64, %65 : vector<8x64xf32>
    %67 = math.tanh %66 : vector<8x64xf32>
    %68 = arith.mulf %63, %67 : vector<8x64xf32>
    %69 = arith.addf %49, %68 : vector<8x64xf32>
    %70 = vector.extract_strided_slice %5 {offsets = [24, 0], sizes = [8, 256], strides = [1, 1]} : vector<128x256xf32> to vector<8x256xf32>
    %cst_18 = arith.constant dense<0.000000e+00> : vector<8x256xf32>
    %71 = tpu.matmul %68, %6, %cst_18 {dimension_numbers = #tpu.dot_dimension_numbers<[1], [0], [0], [1], [0, 0, 1, 1], [], []>} : vector<8x64xf32>, vector<64x256xf32>, vector<8x256xf32> -> vector<8x256xf32>
    %72 = arith.addf %70, %71 : vector<8x256xf32>
    %73 = vector.extract_strided_slice %72 {offsets = [0, 0], sizes = [8, 192], strides = [1, 1]} : vector<8x256xf32> to vector<8x192xf32>
    %74 = arith.negf %73 : vector<8x192xf32>
    %75 = math.exp %74 : vector<8x192xf32>
    %cst_19 = arith.constant 1.000000e+00 : f32
    %76 = vector.broadcast %cst_19 : f32 to vector<8x192xf32>
    %77 = arith.addf %76, %75 : vector<8x192xf32>
    %78 = arith.divf %76, %77 : vector<8x192xf32>
    %79 = vector.extract_strided_slice %72 {offsets = [0, 192], sizes = [8, 64], strides = [1, 1]} : vector<8x256xf32> to vector<8x64xf32>
    %80 = math.tanh %79 : vector<8x64xf32>
    %81 = vector.extract_strided_slice %78 {offsets = [0, 0], sizes = [8, 64], strides = [1, 1]} : vector<8x192xf32> to vector<8x64xf32>
    %82 = vector.extract_strided_slice %78 {offsets = [0, 64], sizes = [8, 64], strides = [1, 1]} : vector<8x192xf32> to vector<8x64xf32>
    %83 = vector.extract_strided_slice %78 {offsets = [0, 128], sizes = [8, 64], strides = [1, 1]} : vector<8x192xf32> to vector<8x64xf32>
    %84 = arith.mulf %82, %66 : vector<8x64xf32>
    %85 = arith.mulf %81, %80 : vector<8x64xf32>
    %86 = arith.addf %84, %85 : vector<8x64xf32>
    %87 = math.tanh %86 : vector<8x64xf32>
    %88 = arith.mulf %83, %87 : vector<8x64xf32>
    %89 = arith.addf %69, %88 : vector<8x64xf32>
    %90 = vector.extract_strided_slice %5 {offsets = [32, 0], sizes = [8, 256], strides = [1, 1]} : vector<128x256xf32> to vector<8x256xf32>
    %cst_20 = arith.constant dense<0.000000e+00> : vector<8x256xf32>
    %91 = tpu.matmul %88, %6, %cst_20 {dimension_numbers = #tpu.dot_dimension_numbers<[1], [0], [0], [1], [0, 0, 1, 1], [], []>} : vector<8x64xf32>, vector<64x256xf32>, vector<8x256xf32> -> vector<8x256xf32>
    %92 = arith.addf %90, %91 : vector<8x256xf32>
    %93 = vector.extract_strided_slice %92 {offsets = [0, 0], sizes = [8, 192], strides = [1, 1]} : vector<8x256xf32> to vector<8x192xf32>
    %94 = arith.negf %93 : vector<8x192xf32>
    %95 = math.exp %94 : vector<8x192xf32>
    %cst_21 = arith.constant 1.000000e+00 : f32
    %96 = vector.broadcast %cst_21 : f32 to vector<8x192xf32>
    %97 = arith.addf %96, %95 : vector<8x192xf32>
    %98 = arith.divf %96, %97 : vector<8x192xf32>
    %99 = vector.extract_strided_slice %92 {offsets = [0, 192], sizes = [8, 64], strides = [1, 1]} : vector<8x256xf32> to vector<8x64xf32>
    %100 = math.tanh %99 : vector<8x64xf32>
    %101 = vector.extract_strided_slice %98 {offsets = [0, 0], sizes = [8, 64], strides = [1, 1]} : vector<8x192xf32> to vector<8x64xf32>
    %102 = vector.extract_strided_slice %98 {offsets = [0, 64], sizes = [8, 64], strides = [1, 1]} : vector<8x192xf32> to vector<8x64xf32>
    %103 = vector.extract_strided_slice %98 {offsets = [0, 128], sizes = [8, 64], strides = [1, 1]} : vector<8x192xf32> to vector<8x64xf32>
    %104 = arith.mulf %102, %86 : vector<8x64xf32>
    %105 = arith.mulf %101, %100 : vector<8x64xf32>
    %106 = arith.addf %104, %105 : vector<8x64xf32>
    %107 = math.tanh %106 : vector<8x64xf32>
    %108 = arith.mulf %103, %107 : vector<8x64xf32>
    %109 = arith.addf %89, %108 : vector<8x64xf32>
    %110 = vector.extract_strided_slice %5 {offsets = [40, 0], sizes = [8, 256], strides = [1, 1]} : vector<128x256xf32> to vector<8x256xf32>
    %cst_22 = arith.constant dense<0.000000e+00> : vector<8x256xf32>
    %111 = tpu.matmul %108, %6, %cst_22 {dimension_numbers = #tpu.dot_dimension_numbers<[1], [0], [0], [1], [0, 0, 1, 1], [], []>} : vector<8x64xf32>, vector<64x256xf32>, vector<8x256xf32> -> vector<8x256xf32>
    %112 = arith.addf %110, %111 : vector<8x256xf32>
    %113 = vector.extract_strided_slice %112 {offsets = [0, 0], sizes = [8, 192], strides = [1, 1]} : vector<8x256xf32> to vector<8x192xf32>
    %114 = arith.negf %113 : vector<8x192xf32>
    %115 = math.exp %114 : vector<8x192xf32>
    %cst_23 = arith.constant 1.000000e+00 : f32
    %116 = vector.broadcast %cst_23 : f32 to vector<8x192xf32>
    %117 = arith.addf %116, %115 : vector<8x192xf32>
    %118 = arith.divf %116, %117 : vector<8x192xf32>
    %119 = vector.extract_strided_slice %112 {offsets = [0, 192], sizes = [8, 64], strides = [1, 1]} : vector<8x256xf32> to vector<8x64xf32>
    %120 = math.tanh %119 : vector<8x64xf32>
    %121 = vector.extract_strided_slice %118 {offsets = [0, 0], sizes = [8, 64], strides = [1, 1]} : vector<8x192xf32> to vector<8x64xf32>
    %122 = vector.extract_strided_slice %118 {offsets = [0, 64], sizes = [8, 64], strides = [1, 1]} : vector<8x192xf32> to vector<8x64xf32>
    %123 = vector.extract_strided_slice %118 {offsets = [0, 128], sizes = [8, 64], strides = [1, 1]} : vector<8x192xf32> to vector<8x64xf32>
    %124 = arith.mulf %122, %106 : vector<8x64xf32>
    %125 = arith.mulf %121, %120 : vector<8x64xf32>
    %126 = arith.addf %124, %125 : vector<8x64xf32>
    %127 = math.tanh %126 : vector<8x64xf32>
    %128 = arith.mulf %123, %127 : vector<8x64xf32>
    %129 = arith.addf %109, %128 : vector<8x64xf32>
    %130 = vector.extract_strided_slice %5 {offsets = [48, 0], sizes = [8, 256], strides = [1, 1]} : vector<128x256xf32> to vector<8x256xf32>
    %cst_24 = arith.constant dense<0.000000e+00> : vector<8x256xf32>
    %131 = tpu.matmul %128, %6, %cst_24 {dimension_numbers = #tpu.dot_dimension_numbers<[1], [0], [0], [1], [0, 0, 1, 1], [], []>} : vector<8x64xf32>, vector<64x256xf32>, vector<8x256xf32> -> vector<8x256xf32>
    %132 = arith.addf %130, %131 : vector<8x256xf32>
    %133 = vector.extract_strided_slice %132 {offsets = [0, 0], sizes = [8, 192], strides = [1, 1]} : vector<8x256xf32> to vector<8x192xf32>
    %134 = arith.negf %133 : vector<8x192xf32>
    %135 = math.exp %134 : vector<8x192xf32>
    %cst_25 = arith.constant 1.000000e+00 : f32
    %136 = vector.broadcast %cst_25 : f32 to vector<8x192xf32>
    %137 = arith.addf %136, %135 : vector<8x192xf32>
    %138 = arith.divf %136, %137 : vector<8x192xf32>
    %139 = vector.extract_strided_slice %132 {offsets = [0, 192], sizes = [8, 64], strides = [1, 1]} : vector<8x256xf32> to vector<8x64xf32>
    %140 = math.tanh %139 : vector<8x64xf32>
    %141 = vector.extract_strided_slice %138 {offsets = [0, 0], sizes = [8, 64], strides = [1, 1]} : vector<8x192xf32> to vector<8x64xf32>
    %142 = vector.extract_strided_slice %138 {offsets = [0, 64], sizes = [8, 64], strides = [1, 1]} : vector<8x192xf32> to vector<8x64xf32>
    %143 = vector.extract_strided_slice %138 {offsets = [0, 128], sizes = [8, 64], strides = [1, 1]} : vector<8x192xf32> to vector<8x64xf32>
    %144 = arith.mulf %142, %126 : vector<8x64xf32>
    %145 = arith.mulf %141, %140 : vector<8x64xf32>
    %146 = arith.addf %144, %145 : vector<8x64xf32>
    %147 = math.tanh %146 : vector<8x64xf32>
    %148 = arith.mulf %143, %147 : vector<8x64xf32>
    %149 = arith.addf %129, %148 : vector<8x64xf32>
    %150 = vector.extract_strided_slice %5 {offsets = [56, 0], sizes = [8, 256], strides = [1, 1]} : vector<128x256xf32> to vector<8x256xf32>
    %cst_26 = arith.constant dense<0.000000e+00> : vector<8x256xf32>
    %151 = tpu.matmul %148, %6, %cst_26 {dimension_numbers = #tpu.dot_dimension_numbers<[1], [0], [0], [1], [0, 0, 1, 1], [], []>} : vector<8x64xf32>, vector<64x256xf32>, vector<8x256xf32> -> vector<8x256xf32>
    %152 = arith.addf %150, %151 : vector<8x256xf32>
    %153 = vector.extract_strided_slice %152 {offsets = [0, 0], sizes = [8, 192], strides = [1, 1]} : vector<8x256xf32> to vector<8x192xf32>
    %154 = arith.negf %153 : vector<8x192xf32>
    %155 = math.exp %154 : vector<8x192xf32>
    %cst_27 = arith.constant 1.000000e+00 : f32
    %156 = vector.broadcast %cst_27 : f32 to vector<8x192xf32>
    %157 = arith.addf %156, %155 : vector<8x192xf32>
    %158 = arith.divf %156, %157 : vector<8x192xf32>
    %159 = vector.extract_strided_slice %152 {offsets = [0, 192], sizes = [8, 64], strides = [1, 1]} : vector<8x256xf32> to vector<8x64xf32>
    %160 = math.tanh %159 : vector<8x64xf32>
    %161 = vector.extract_strided_slice %158 {offsets = [0, 0], sizes = [8, 64], strides = [1, 1]} : vector<8x192xf32> to vector<8x64xf32>
    %162 = vector.extract_strided_slice %158 {offsets = [0, 64], sizes = [8, 64], strides = [1, 1]} : vector<8x192xf32> to vector<8x64xf32>
    %163 = vector.extract_strided_slice %158 {offsets = [0, 128], sizes = [8, 64], strides = [1, 1]} : vector<8x192xf32> to vector<8x64xf32>
    %164 = arith.mulf %162, %146 : vector<8x64xf32>
    %165 = arith.mulf %161, %160 : vector<8x64xf32>
    %166 = arith.addf %164, %165 : vector<8x64xf32>
    %167 = math.tanh %166 : vector<8x64xf32>
    %168 = arith.mulf %163, %167 : vector<8x64xf32>
    %169 = arith.addf %149, %168 : vector<8x64xf32>
    %170 = vector.extract_strided_slice %5 {offsets = [64, 0], sizes = [8, 256], strides = [1, 1]} : vector<128x256xf32> to vector<8x256xf32>
    %cst_28 = arith.constant dense<0.000000e+00> : vector<8x256xf32>
    %171 = tpu.matmul %168, %6, %cst_28 {dimension_numbers = #tpu.dot_dimension_numbers<[1], [0], [0], [1], [0, 0, 1, 1], [], []>} : vector<8x64xf32>, vector<64x256xf32>, vector<8x256xf32> -> vector<8x256xf32>
    %172 = arith.addf %170, %171 : vector<8x256xf32>
    %173 = vector.extract_strided_slice %172 {offsets = [0, 0], sizes = [8, 192], strides = [1, 1]} : vector<8x256xf32> to vector<8x192xf32>
    %174 = arith.negf %173 : vector<8x192xf32>
    %175 = math.exp %174 : vector<8x192xf32>
    %cst_29 = arith.constant 1.000000e+00 : f32
    %176 = vector.broadcast %cst_29 : f32 to vector<8x192xf32>
    %177 = arith.addf %176, %175 : vector<8x192xf32>
    %178 = arith.divf %176, %177 : vector<8x192xf32>
    %179 = vector.extract_strided_slice %172 {offsets = [0, 192], sizes = [8, 64], strides = [1, 1]} : vector<8x256xf32> to vector<8x64xf32>
    %180 = math.tanh %179 : vector<8x64xf32>
    %181 = vector.extract_strided_slice %178 {offsets = [0, 0], sizes = [8, 64], strides = [1, 1]} : vector<8x192xf32> to vector<8x64xf32>
    %182 = vector.extract_strided_slice %178 {offsets = [0, 64], sizes = [8, 64], strides = [1, 1]} : vector<8x192xf32> to vector<8x64xf32>
    %183 = vector.extract_strided_slice %178 {offsets = [0, 128], sizes = [8, 64], strides = [1, 1]} : vector<8x192xf32> to vector<8x64xf32>
    %184 = arith.mulf %182, %166 : vector<8x64xf32>
    %185 = arith.mulf %181, %180 : vector<8x64xf32>
    %186 = arith.addf %184, %185 : vector<8x64xf32>
    %187 = math.tanh %186 : vector<8x64xf32>
    %188 = arith.mulf %183, %187 : vector<8x64xf32>
    %189 = arith.addf %169, %188 : vector<8x64xf32>
    %190 = vector.extract_strided_slice %5 {offsets = [72, 0], sizes = [8, 256], strides = [1, 1]} : vector<128x256xf32> to vector<8x256xf32>
    %cst_30 = arith.constant dense<0.000000e+00> : vector<8x256xf32>
    %191 = tpu.matmul %188, %6, %cst_30 {dimension_numbers = #tpu.dot_dimension_numbers<[1], [0], [0], [1], [0, 0, 1, 1], [], []>} : vector<8x64xf32>, vector<64x256xf32>, vector<8x256xf32> -> vector<8x256xf32>
    %192 = arith.addf %190, %191 : vector<8x256xf32>
    %193 = vector.extract_strided_slice %192 {offsets = [0, 0], sizes = [8, 192], strides = [1, 1]} : vector<8x256xf32> to vector<8x192xf32>
    %194 = arith.negf %193 : vector<8x192xf32>
    %195 = math.exp %194 : vector<8x192xf32>
    %cst_31 = arith.constant 1.000000e+00 : f32
    %196 = vector.broadcast %cst_31 : f32 to vector<8x192xf32>
    %197 = arith.addf %196, %195 : vector<8x192xf32>
    %198 = arith.divf %196, %197 : vector<8x192xf32>
    %199 = vector.extract_strided_slice %192 {offsets = [0, 192], sizes = [8, 64], strides = [1, 1]} : vector<8x256xf32> to vector<8x64xf32>
    %200 = math.tanh %199 : vector<8x64xf32>
    %201 = vector.extract_strided_slice %198 {offsets = [0, 0], sizes = [8, 64], strides = [1, 1]} : vector<8x192xf32> to vector<8x64xf32>
    %202 = vector.extract_strided_slice %198 {offsets = [0, 64], sizes = [8, 64], strides = [1, 1]} : vector<8x192xf32> to vector<8x64xf32>
    %203 = vector.extract_strided_slice %198 {offsets = [0, 128], sizes = [8, 64], strides = [1, 1]} : vector<8x192xf32> to vector<8x64xf32>
    %204 = arith.mulf %202, %186 : vector<8x64xf32>
    %205 = arith.mulf %201, %200 : vector<8x64xf32>
    %206 = arith.addf %204, %205 : vector<8x64xf32>
    %207 = math.tanh %206 : vector<8x64xf32>
    %208 = arith.mulf %203, %207 : vector<8x64xf32>
    %209 = arith.addf %189, %208 : vector<8x64xf32>
    %210 = vector.extract_strided_slice %5 {offsets = [80, 0], sizes = [8, 256], strides = [1, 1]} : vector<128x256xf32> to vector<8x256xf32>
    %cst_32 = arith.constant dense<0.000000e+00> : vector<8x256xf32>
    %211 = tpu.matmul %208, %6, %cst_32 {dimension_numbers = #tpu.dot_dimension_numbers<[1], [0], [0], [1], [0, 0, 1, 1], [], []>} : vector<8x64xf32>, vector<64x256xf32>, vector<8x256xf32> -> vector<8x256xf32>
    %212 = arith.addf %210, %211 : vector<8x256xf32>
    %213 = vector.extract_strided_slice %212 {offsets = [0, 0], sizes = [8, 192], strides = [1, 1]} : vector<8x256xf32> to vector<8x192xf32>
    %214 = arith.negf %213 : vector<8x192xf32>
    %215 = math.exp %214 : vector<8x192xf32>
    %cst_33 = arith.constant 1.000000e+00 : f32
    %216 = vector.broadcast %cst_33 : f32 to vector<8x192xf32>
    %217 = arith.addf %216, %215 : vector<8x192xf32>
    %218 = arith.divf %216, %217 : vector<8x192xf32>
    %219 = vector.extract_strided_slice %212 {offsets = [0, 192], sizes = [8, 64], strides = [1, 1]} : vector<8x256xf32> to vector<8x64xf32>
    %220 = math.tanh %219 : vector<8x64xf32>
    %221 = vector.extract_strided_slice %218 {offsets = [0, 0], sizes = [8, 64], strides = [1, 1]} : vector<8x192xf32> to vector<8x64xf32>
    %222 = vector.extract_strided_slice %218 {offsets = [0, 64], sizes = [8, 64], strides = [1, 1]} : vector<8x192xf32> to vector<8x64xf32>
    %223 = vector.extract_strided_slice %218 {offsets = [0, 128], sizes = [8, 64], strides = [1, 1]} : vector<8x192xf32> to vector<8x64xf32>
    %224 = arith.mulf %222, %206 : vector<8x64xf32>
    %225 = arith.mulf %221, %220 : vector<8x64xf32>
    %226 = arith.addf %224, %225 : vector<8x64xf32>
    %227 = math.tanh %226 : vector<8x64xf32>
    %228 = arith.mulf %223, %227 : vector<8x64xf32>
    %229 = arith.addf %209, %228 : vector<8x64xf32>
    %230 = vector.extract_strided_slice %5 {offsets = [88, 0], sizes = [8, 256], strides = [1, 1]} : vector<128x256xf32> to vector<8x256xf32>
    %cst_34 = arith.constant dense<0.000000e+00> : vector<8x256xf32>
    %231 = tpu.matmul %228, %6, %cst_34 {dimension_numbers = #tpu.dot_dimension_numbers<[1], [0], [0], [1], [0, 0, 1, 1], [], []>} : vector<8x64xf32>, vector<64x256xf32>, vector<8x256xf32> -> vector<8x256xf32>
    %232 = arith.addf %230, %231 : vector<8x256xf32>
    %233 = vector.extract_strided_slice %232 {offsets = [0, 0], sizes = [8, 192], strides = [1, 1]} : vector<8x256xf32> to vector<8x192xf32>
    %234 = arith.negf %233 : vector<8x192xf32>
    %235 = math.exp %234 : vector<8x192xf32>
    %cst_35 = arith.constant 1.000000e+00 : f32
    %236 = vector.broadcast %cst_35 : f32 to vector<8x192xf32>
    %237 = arith.addf %236, %235 : vector<8x192xf32>
    %238 = arith.divf %236, %237 : vector<8x192xf32>
    %239 = vector.extract_strided_slice %232 {offsets = [0, 192], sizes = [8, 64], strides = [1, 1]} : vector<8x256xf32> to vector<8x64xf32>
    %240 = math.tanh %239 : vector<8x64xf32>
    %241 = vector.extract_strided_slice %238 {offsets = [0, 0], sizes = [8, 64], strides = [1, 1]} : vector<8x192xf32> to vector<8x64xf32>
    %242 = vector.extract_strided_slice %238 {offsets = [0, 64], sizes = [8, 64], strides = [1, 1]} : vector<8x192xf32> to vector<8x64xf32>
    %243 = vector.extract_strided_slice %238 {offsets = [0, 128], sizes = [8, 64], strides = [1, 1]} : vector<8x192xf32> to vector<8x64xf32>
    %244 = arith.mulf %242, %226 : vector<8x64xf32>
    %245 = arith.mulf %241, %240 : vector<8x64xf32>
    %246 = arith.addf %244, %245 : vector<8x64xf32>
    %247 = math.tanh %246 : vector<8x64xf32>
    %248 = arith.mulf %243, %247 : vector<8x64xf32>
    %249 = arith.addf %229, %248 : vector<8x64xf32>
    %250 = vector.extract_strided_slice %5 {offsets = [96, 0], sizes = [8, 256], strides = [1, 1]} : vector<128x256xf32> to vector<8x256xf32>
    %cst_36 = arith.constant dense<0.000000e+00> : vector<8x256xf32>
    %251 = tpu.matmul %248, %6, %cst_36 {dimension_numbers = #tpu.dot_dimension_numbers<[1], [0], [0], [1], [0, 0, 1, 1], [], []>} : vector<8x64xf32>, vector<64x256xf32>, vector<8x256xf32> -> vector<8x256xf32>
    %252 = arith.addf %250, %251 : vector<8x256xf32>
    %253 = vector.extract_strided_slice %252 {offsets = [0, 0], sizes = [8, 192], strides = [1, 1]} : vector<8x256xf32> to vector<8x192xf32>
    %254 = arith.negf %253 : vector<8x192xf32>
    %255 = math.exp %254 : vector<8x192xf32>
    %cst_37 = arith.constant 1.000000e+00 : f32
    %256 = vector.broadcast %cst_37 : f32 to vector<8x192xf32>
    %257 = arith.addf %256, %255 : vector<8x192xf32>
    %258 = arith.divf %256, %257 : vector<8x192xf32>
    %259 = vector.extract_strided_slice %252 {offsets = [0, 192], sizes = [8, 64], strides = [1, 1]} : vector<8x256xf32> to vector<8x64xf32>
    %260 = math.tanh %259 : vector<8x64xf32>
    %261 = vector.extract_strided_slice %258 {offsets = [0, 0], sizes = [8, 64], strides = [1, 1]} : vector<8x192xf32> to vector<8x64xf32>
    %262 = vector.extract_strided_slice %258 {offsets = [0, 64], sizes = [8, 64], strides = [1, 1]} : vector<8x192xf32> to vector<8x64xf32>
    %263 = vector.extract_strided_slice %258 {offsets = [0, 128], sizes = [8, 64], strides = [1, 1]} : vector<8x192xf32> to vector<8x64xf32>
    %264 = arith.mulf %262, %246 : vector<8x64xf32>
    %265 = arith.mulf %261, %260 : vector<8x64xf32>
    %266 = arith.addf %264, %265 : vector<8x64xf32>
    %267 = math.tanh %266 : vector<8x64xf32>
    %268 = arith.mulf %263, %267 : vector<8x64xf32>
    %269 = arith.addf %249, %268 : vector<8x64xf32>
    %270 = vector.extract_strided_slice %5 {offsets = [104, 0], sizes = [8, 256], strides = [1, 1]} : vector<128x256xf32> to vector<8x256xf32>
    %cst_38 = arith.constant dense<0.000000e+00> : vector<8x256xf32>
    %271 = tpu.matmul %268, %6, %cst_38 {dimension_numbers = #tpu.dot_dimension_numbers<[1], [0], [0], [1], [0, 0, 1, 1], [], []>} : vector<8x64xf32>, vector<64x256xf32>, vector<8x256xf32> -> vector<8x256xf32>
    %272 = arith.addf %270, %271 : vector<8x256xf32>
    %273 = vector.extract_strided_slice %272 {offsets = [0, 0], sizes = [8, 192], strides = [1, 1]} : vector<8x256xf32> to vector<8x192xf32>
    %274 = arith.negf %273 : vector<8x192xf32>
    %275 = math.exp %274 : vector<8x192xf32>
    %cst_39 = arith.constant 1.000000e+00 : f32
    %276 = vector.broadcast %cst_39 : f32 to vector<8x192xf32>
    %277 = arith.addf %276, %275 : vector<8x192xf32>
    %278 = arith.divf %276, %277 : vector<8x192xf32>
    %279 = vector.extract_strided_slice %272 {offsets = [0, 192], sizes = [8, 64], strides = [1, 1]} : vector<8x256xf32> to vector<8x64xf32>
    %280 = math.tanh %279 : vector<8x64xf32>
    %281 = vector.extract_strided_slice %278 {offsets = [0, 0], sizes = [8, 64], strides = [1, 1]} : vector<8x192xf32> to vector<8x64xf32>
    %282 = vector.extract_strided_slice %278 {offsets = [0, 64], sizes = [8, 64], strides = [1, 1]} : vector<8x192xf32> to vector<8x64xf32>
    %283 = vector.extract_strided_slice %278 {offsets = [0, 128], sizes = [8, 64], strides = [1, 1]} : vector<8x192xf32> to vector<8x64xf32>
    %284 = arith.mulf %282, %266 : vector<8x64xf32>
    %285 = arith.mulf %281, %280 : vector<8x64xf32>
    %286 = arith.addf %284, %285 : vector<8x64xf32>
    %287 = math.tanh %286 : vector<8x64xf32>
    %288 = arith.mulf %283, %287 : vector<8x64xf32>
    %289 = arith.addf %269, %288 : vector<8x64xf32>
    %290 = vector.extract_strided_slice %5 {offsets = [112, 0], sizes = [8, 256], strides = [1, 1]} : vector<128x256xf32> to vector<8x256xf32>
    %cst_40 = arith.constant dense<0.000000e+00> : vector<8x256xf32>
    %291 = tpu.matmul %288, %6, %cst_40 {dimension_numbers = #tpu.dot_dimension_numbers<[1], [0], [0], [1], [0, 0, 1, 1], [], []>} : vector<8x64xf32>, vector<64x256xf32>, vector<8x256xf32> -> vector<8x256xf32>
    %292 = arith.addf %290, %291 : vector<8x256xf32>
    %293 = vector.extract_strided_slice %292 {offsets = [0, 0], sizes = [8, 192], strides = [1, 1]} : vector<8x256xf32> to vector<8x192xf32>
    %294 = arith.negf %293 : vector<8x192xf32>
    %295 = math.exp %294 : vector<8x192xf32>
    %cst_41 = arith.constant 1.000000e+00 : f32
    %296 = vector.broadcast %cst_41 : f32 to vector<8x192xf32>
    %297 = arith.addf %296, %295 : vector<8x192xf32>
    %298 = arith.divf %296, %297 : vector<8x192xf32>
    %299 = vector.extract_strided_slice %292 {offsets = [0, 192], sizes = [8, 64], strides = [1, 1]} : vector<8x256xf32> to vector<8x64xf32>
    %300 = math.tanh %299 : vector<8x64xf32>
    %301 = vector.extract_strided_slice %298 {offsets = [0, 0], sizes = [8, 64], strides = [1, 1]} : vector<8x192xf32> to vector<8x64xf32>
    %302 = vector.extract_strided_slice %298 {offsets = [0, 64], sizes = [8, 64], strides = [1, 1]} : vector<8x192xf32> to vector<8x64xf32>
    %303 = vector.extract_strided_slice %298 {offsets = [0, 128], sizes = [8, 64], strides = [1, 1]} : vector<8x192xf32> to vector<8x64xf32>
    %304 = arith.mulf %302, %286 : vector<8x64xf32>
    %305 = arith.mulf %301, %300 : vector<8x64xf32>
    %306 = arith.addf %304, %305 : vector<8x64xf32>
    %307 = math.tanh %306 : vector<8x64xf32>
    %308 = arith.mulf %303, %307 : vector<8x64xf32>
    %309 = arith.addf %289, %308 : vector<8x64xf32>
    %310 = vector.extract_strided_slice %5 {offsets = [120, 0], sizes = [8, 256], strides = [1, 1]} : vector<128x256xf32> to vector<8x256xf32>
    %cst_42 = arith.constant dense<0.000000e+00> : vector<8x256xf32>
    %311 = tpu.matmul %308, %6, %cst_42 {dimension_numbers = #tpu.dot_dimension_numbers<[1], [0], [0], [1], [0, 0, 1, 1], [], []>} : vector<8x64xf32>, vector<64x256xf32>, vector<8x256xf32> -> vector<8x256xf32>
    %312 = arith.addf %310, %311 : vector<8x256xf32>
    %313 = vector.extract_strided_slice %312 {offsets = [0, 0], sizes = [8, 192], strides = [1, 1]} : vector<8x256xf32> to vector<8x192xf32>
    %314 = arith.negf %313 : vector<8x192xf32>
    %315 = math.exp %314 : vector<8x192xf32>
    %cst_43 = arith.constant 1.000000e+00 : f32
    %316 = vector.broadcast %cst_43 : f32 to vector<8x192xf32>
    %317 = arith.addf %316, %315 : vector<8x192xf32>
    %318 = arith.divf %316, %317 : vector<8x192xf32>
    %319 = vector.extract_strided_slice %312 {offsets = [0, 192], sizes = [8, 64], strides = [1, 1]} : vector<8x256xf32> to vector<8x64xf32>
    %320 = math.tanh %319 : vector<8x64xf32>
    %321 = vector.extract_strided_slice %318 {offsets = [0, 0], sizes = [8, 64], strides = [1, 1]} : vector<8x192xf32> to vector<8x64xf32>
    %322 = vector.extract_strided_slice %318 {offsets = [0, 64], sizes = [8, 64], strides = [1, 1]} : vector<8x192xf32> to vector<8x64xf32>
    %323 = vector.extract_strided_slice %318 {offsets = [0, 128], sizes = [8, 64], strides = [1, 1]} : vector<8x192xf32> to vector<8x64xf32>
    %324 = arith.mulf %322, %306 : vector<8x64xf32>
    %325 = arith.mulf %321, %320 : vector<8x64xf32>
    %326 = arith.addf %324, %325 : vector<8x64xf32>
    %327 = math.tanh %326 : vector<8x64xf32>
    %328 = arith.mulf %323, %327 : vector<8x64xf32>
    %329 = arith.addf %309, %328 : vector<8x64xf32>
    %c0_44 = arith.constant 0 : index
    %c0_45 = arith.constant 0 : index
    %330 = vector.load %arg7[%c0_44, %c0_45] : memref<64x2xf32, #tpu.memory_space<vmem>>, vector<64x2xf32>
    %cst_46 = arith.constant dense<0.000000e+00> : vector<8x2xf32>
    %331 = tpu.matmul %329, %330, %cst_46 {dimension_numbers = #tpu.dot_dimension_numbers<[1], [0], [0], [1], [0, 0, 1, 1], [], []>} : vector<8x64xf32>, vector<64x2xf32>, vector<8x2xf32> -> vector<8x2xf32>
    %c0_47 = arith.constant 0 : index
    %c0_48 = arith.constant 0 : index
    %332 = vector.load %arg8[%c0_47, %c0_48] : memref<1x2xf32, #tpu.memory_space<vmem>>, vector<1x2xf32>
    %333 = vector.broadcast %332 : vector<1x2xf32> to vector<8x2xf32>
    %334 = arith.addf %331, %333 : vector<8x2xf32>
    %cst_49 = arith.constant dense<0xFF800000> : vector<8xf32>
    %335 = vector.multi_reduction <maximumf>, %334, %cst_49 [1] : vector<8x2xf32> to vector<8xf32>
    %336 = vector.shape_cast %335 : vector<8xf32> to vector<8x1xf32>
    %337 = vector.broadcast %336 : vector<8x1xf32> to vector<8x2xf32>
    %338 = arith.subf %334, %337 : vector<8x2xf32>
    %339 = math.exp %338 : vector<8x2xf32>
    %cst_50 = arith.constant dense<0.000000e+00> : vector<8xf32>
    %340 = vector.multi_reduction <add>, %339, %cst_50 [1] : vector<8x2xf32> to vector<8xf32>
    %341 = vector.shape_cast %340 : vector<8xf32> to vector<8x1xf32>
    %342 = math.log %341 : vector<8x1xf32>
    %343 = vector.broadcast %342 : vector<8x1xf32> to vector<8x2xf32>
    %344 = arith.subf %338, %343 : vector<8x2xf32>
    %c0_51 = arith.constant 0 : index
    %c0_52 = arith.constant 0 : index
    %345 = vector.load %arg9[%c0_51, %c0_52] : memref<8x2xf32, #tpu.memory_space<vmem>>, vector<8x2xf32>
    tpu.vector_store %arg9[%c0_51, %c0_52], %344 {strides = array<i32>} : memref<8x2xf32, #tpu.memory_space<vmem>>, vector<8x2xf32>,
    return
  }
  func.func @transform_0(%arg0: i32) -> (i32, i32) {
    %c0_i32 = arith.constant 0 : i32
    %c0_i32_0 = arith.constant 0 : i32
    %c0_i32_1 = arith.constant 0 : i32
    return %c0_i32, %c0_i32_0 : i32, i32
  }
  func.func @transform_1(%arg0: i32) -> (i32, i32) {
    %c0_i32 = arith.constant 0 : i32
    %c0_i32_0 = arith.constant 0 : i32
    %c0_i32_1 = arith.constant 0 : i32
    return %c0_i32, %c0_i32_0 : i32, i32
  }
  func.func @transform_2(%arg0: i32) -> (i32, i32) {
    %c0_i32 = arith.constant 0 : i32
    %c0_i32_0 = arith.constant 0 : i32
    %c0_i32_1 = arith.constant 0 : i32
    return %c0_i32, %c0_i32_0 : i32, i32
  }
  func.func @transform_3(%arg0: i32) -> (i32, i32) {
    %c0_i32 = arith.constant 0 : i32
    %c0_i32_0 = arith.constant 0 : i32
    %c0_i32_1 = arith.constant 0 : i32
    return %c0_i32, %c0_i32_0 : i32, i32
  }
  func.func @transform_4(%arg0: i32) -> (i32, i32) {
    %c0_i32 = arith.constant 0 : i32
    %c0_i32_0 = arith.constant 0 : i32
    %c0_i32_1 = arith.constant 0 : i32
    return %c0_i32, %c0_i32_0 : i32, i32
  }
  func.func @transform_5(%arg0: i32) -> (i32, i32) {
    %c0_i32 = arith.constant 0 : i32
    %c0_i32_0 = arith.constant 0 : i32
    %c0_i32_1 = arith.constant 0 : i32
    return %c0_i32, %c0_i32_0 : i32, i32
  }
  func.func @transform_6(%arg0: i32) -> (i32, i32) {
    %c0_i32 = arith.constant 0 : i32
    %c0_i32_0 = arith.constant 0 : i32
    %c0_i32_1 = arith.constant 0 : i32
    return %c0_i32, %c0_i32_0 : i32, i32
  }
  func.func @transform_7(%arg0: i32) -> (i32, i32) {
    %c0_i32 = arith.constant 0 : i32
    %c0_i32_0 = arith.constant 0 : i32
    %c0_i32_1 = arith.constant 0 : i32
    return %c0_i32, %c0_i32_0 : i32, i32
  }
  func.func @transform_8(%arg0: i32) -> (i32, i32) {
    %c0_i32 = arith.constant 0 : i32
    %c0_i32_0 = arith.constant 0 : i32
    %c0_i32_1 = arith.constant 0 : i32
    return %c0_i32, %c0_i32_0 : i32, i32
  }
}

</mosaic_0001>

<llo_original>
// kernel: tpu_custom_call.1
$region0: #{tpu_custom_call.1}
  #allocation0 [shape = 'u32[]', space=smem, size = 0x4, offset = 0x4, fixed_abs, tag = 'smem constant byte address 0x4 - core index']
  #allocation1 [shape = 'u32[144,128]{1,0:T(1,128)}', space=vmem, size = 0x12000, scoped, tag = 'internal scratch']
  %s0 = inlined_call_operand.vmem [shape: f32[128,96], index: 0, kind: input, shape index: {}]
  %s1 = inlined_call_operand.vmem [shape: f32[96,256], index: 1, kind: input, shape index: {}]
  %s2 = inlined_call_operand.vmem [shape: f32[1,256], index: 2, kind: input, shape index: {}]
  %s3 = inlined_call_operand.hbm [shape: f32[64,256], index: 3, kind: input, shape index: {}]
  %s4 = inlined_call_operand.vmem [shape: f32[8,64], index: 4, kind: input, shape index: {}]
  %s5 = inlined_call_operand.vmem [shape: f32[8,64], index: 5, kind: input, shape index: {}]
  %s6 = inlined_call_operand.vmem [shape: f32[64,2], index: 6, kind: input, shape index: {}]
  %s7 = inlined_call_operand.vmem [shape: f32[1,2], index: 7, kind: input, shape index: {}]
  %s8 = inlined_call_operand.vmem [shape: f32[8,2], index: 8, kind: output, shape index: {}]
  %s9 = sld [smem:[#allocation0]]
  $region46: #{tpu_custom_call.1} parent=0
    _
  %s11 = ssub.s32 1, %s9
  %s12 = scalar_select 0, %s11, %s9
  $region1: #{tpu_custom_call.1} parent=0
    #allocation2 [shape = 'u8[65536]{0}', space=vmem, size = 0x10000, scoped, tag = 'input window, operand 3, single buffered']
    #allocation3 [shape = 's32[1]{0}', space=sflag, size = 0x4, scoped, tag = 'scoped memory for tpu_custom_call.1']
    %13 = vsyncpa [#allocation3], 0
    // Predicated region
    $region2: #{tpu_custom_call.1} parent=1 // pred_check
      _
    $region3: #{tpu_custom_call.1} parent=1 // pred_check_branch
      %15 = sbr.rel (0) target = $region5
    $region4: #{tpu_custom_call.1} parent=1 // pred_region
      _
    $region5: #{tpu_custom_call.1} parent=1 // pred_fallthru
      _
    // Predicated region
    $region6: #{tpu_custom_call.1} parent=1 // pred_check
      _
    $region7: #{tpu_custom_call.1} parent=1 // pred_check_branch
      %17 = sbr.rel (0) target = $region9
    $region8: #{tpu_custom_call.1} parent=1 // pred_region
      _
    $region9: #{tpu_custom_call.1} parent=1 // pred_fallthru
      _
    // Predicated region
    $region10: #{tpu_custom_call.1} parent=1 // pred_check
      _
    $region11: #{tpu_custom_call.1} parent=1 // pred_check_branch
      %19 = sbr.rel (0) target = $region13
    $region12: #{tpu_custom_call.1} parent=1 // pred_region
      _
    $region13: #{tpu_custom_call.1} parent=1 // pred_fallthru
      _
    // Predicated region
    $region14: #{tpu_custom_call.1} parent=1 // pred_check
      _
    $region15: #{tpu_custom_call.1} parent=1 // pred_check_branch
      %21 = sbr.rel (0) target = $region17
    $region16: #{tpu_custom_call.1} parent=1 // pred_region
      %s23 = ssub.s32 2048, 2048
      %24 = vsyncadd [#allocation3], %s23
      %s25 = sshll.u32 [#allocation2], 4
      %s26 = int_to_ptr.vmem [resolvable:$true] %s25
      %31 = dma.hbm_to_vmem [thread:$0]  %s3, 2048, %s26, [#allocation3], 256, 256, 16
    $region17: #{tpu_custom_call.1} parent=1 // pred_fallthru
      _
    // Predicated region
    $region18: #{tpu_custom_call.1} parent=1 // pred_check
      _
    $region19: #{tpu_custom_call.1} parent=1 // pred_check_branch
      %33 = sbr.rel (0) target = $region21
    $region20: #{tpu_custom_call.1} parent=1 // pred_region
      _
    $region21: #{tpu_custom_call.1} parent=1 // pred_fallthru
      _
    // Predicated region
    $region22: #{tpu_custom_call.1} parent=1 // pred_check
      _
    $region23: #{tpu_custom_call.1} parent=1 // pred_check_branch
      %35 = sbr.rel (0) target = $region25
    $region24: #{tpu_custom_call.1} parent=1 // pred_region
      _
    $region25: #{tpu_custom_call.1} parent=1 // pred_fallthru
      _
    // Predicated region
    $region26: #{tpu_custom_call.1} parent=1 // pred_check
      _
    $region27: #{tpu_custom_call.1} parent=1 // pred_check_branch
      %37 = sbr.rel (0) target = $region29
    $region28: #{tpu_custom_call.1} parent=1 // pred_region
      _
    $region29: #{tpu_custom_call.1} parent=1 // pred_fallthru
      _
    // Predicated region
    $region30: #{tpu_custom_call.1} parent=1 // pred_check
      _
    $region31: #{tpu_custom_call.1} parent=1 // pred_check_branch
      %39 = sbr.rel (0) target = $region33
    $region32: #{tpu_custom_call.1} parent=1 // pred_region
      _
    $region33: #{tpu_custom_call.1} parent=1 // pred_fallthru
      _
    // Predicated region
    $region34: #{tpu_custom_call.1} parent=1 // pred_check
      _
    $region35: #{tpu_custom_call.1} parent=1 // pred_check_branch
      %41 = sbr.rel (0) target = $region37
    $region36: #{tpu_custom_call.1} parent=1 // pred_region
      %42 = dma.done [#allocation3], 2048
    $region37: #{tpu_custom_call.1} parent=1 // pred_fallthru
      _
    %v43 = vld [vmem:[%s0] sm:$0xff]
    %v44 = vld [vmem:[%s0 + $0x8] sm:$0xff]
    %v45 = vld [vmem:[%s0 + $0x10] sm:$0xff]
    %v46 = vld [vmem:[%s0 + $0x18] sm:$0xff]
    %v47 = vld [vmem:[%s0 + $0x20] sm:$0xff]
    %v48 = vld [vmem:[%s0 + $0x28] sm:$0xff]
    %v49 = vld [vmem:[%s0 + $0x30] sm:$0xff]
    %v50 = vld [vmem:[%s0 + $0x38] sm:$0xff]
    %v51 = vld [vmem:[%s0 + $0x40] sm:$0xff]
    %v52 = vld [vmem:[%s0 + $0x48] sm:$0xff]
    %v53 = vld [vmem:[%s0 + $0x50] sm:$0xff]
    %v54 = vld [vmem:[%s0 + $0x58] sm:$0xff]
    %v55 = vld [vmem:[%s0 + $0x60] sm:$0xff]
    %v56 = vld [vmem:[%s0 + $0x68] sm:$0xff]
    %v57 = vld [vmem:[%s0 + $0x70] sm:$0xff]
    %v58 = vld [vmem:[%s0 + $0x78] sm:$0xff]
    %v59 = vld [vmem:[%s1] sm:$0xff]
    %v60 = vld [vmem:[%s1 + $0x8] sm:$0xff]
    %v61 = vld [vmem:[%s1 + $0x10] sm:$0xff]
    %v62 = vld [vmem:[%s1 + $0x18] sm:$0xff]
    %v63 = vld [vmem:[%s1 + $0x20] sm:$0xff]
    %v64 = vld [vmem:[%s1 + $0x28] sm:$0xff]
    %v65 = vld [vmem:[%s1 + $0x30] sm:$0xff]
    %v66 = vld [vmem:[%s1 + $0x38] sm:$0xff]
    %v67 = vld [vmem:[%s1 + $0x40] sm:$0xff]
    %v68 = vld [vmem:[%s1 + $0x48] sm:$0xff]
    %v69 = vld [vmem:[%s1 + $0x50] sm:$0xff]
    %v70 = vld [vmem:[%s1 + $0x58] sm:$0xff]
    %v71 = vld [vmem:[%s1 + $0x60] sm:$0xff]
    %v72 = vld [vmem:[%s1 + $0x68] sm:$0xff]
    %v73 = vld [vmem:[%s1 + $0x70] sm:$0xff]
    %v74 = vld [vmem:[%s1 + $0x78] sm:$0xff]
    %v75 = vld [vmem:[%s1 + $0x80] sm:$0xff]
    %v76 = vld [vmem:[%s1 + $0x88] sm:$0xff]
    %v77 = vld [vmem:[%s1 + $0x90] sm:$0xff]
    %v78 = vld [vmem:[%s1 + $0x98] sm:$0xff]
    %v79 = vld [vmem:[%s1 + $0xa0] sm:$0xff]
    %v80 = vld [vmem:[%s1 + $0xa8] sm:$0xff]
    %v81 = vld [vmem:[%s1 + $0xb0] sm:$0xff]
    %v82 = vld [vmem:[%s1 + $0xb8] sm:$0xff]
    %v83 = vld [vmem:[%s2] sm:$0x3]
    %v85 = vlaneseq
    %v86 = vshrl.u32 %v85, 7
    %v87 = vsub.s32 0, %v86
    %v88 = vrot.slane %v83, %v87
    %v89 = vlaneseq
    %v90 = vshrl.u32 %v89, 7
    %v91 = vsub.s32 1, %v90
    %v92 = vrot.slane %v83, %v91
    %vm95 = vcmask 785408
    %v97 = vsel %vm95, %v43, 0
    %v100 = vsel %vm95, %v44, 0
    %v103 = vsel %vm95, %v45, 0
    %v106 = vsel %vm95, %v46, 0
    %v109 = vsel %vm95, %v47, 0
    %v112 = vsel %vm95, %v48, 0
    %v115 = vsel %vm95, %v49, 0
    %v118 = vsel %vm95, %v50, 0
    %v121 = vsel %vm95, %v51, 0
    %v124 = vsel %vm95, %v52, 0
    %v127 = vsel %vm95, %v53, 0
    %v130 = vsel %vm95, %v54, 0
    %v133 = vsel %vm95, %v55, 0
    %v136 = vsel %vm95, %v56, 0
    %v139 = vsel %vm95, %v57, 0
    %v142 = vsel %vm95, %v58, 0
    %144 = vmatprep.subr.mxu0 0.0
    %145 = vmatpush1.msra.mxu0 0.0
    %146 = vmatprep.subr.mxu0 0.0
    %147 = vmatpush1.msra.mxu0 0.0
    %148 = vmatprep.subr.mxu0 0.0
    %149 = vmatpush1.msra.mxu0 0.0
    %150 = vmatprep.subr.mxu0 0.0
    %151 = vmatpush1.msra.mxu0 0.0
    %152 = vmatprep.subr.mxu0 %v82
    %153 = vmatpush1.msra.mxu0 %v81
    %154 = vmatprep.subr.mxu0 %v80
    %155 = vmatpush1.msra.mxu0 %v79
    %156 = vmatprep.subr.mxu0 %v78
    %157 = vmatpush1.msra.mxu0 %v77
    %158 = vmatprep.subr.mxu0 %v76
    %159 = vmatpush1.msra.mxu0 %v75
    %160 = vmatprep.subr.mxu0 %v74
    %161 = vmatpush1.msra.mxu0 %v73
    %162 = vmatprep.subr.mxu0 %v72
    %163 = vmatpush1.msra.mxu0 %v71
    %164 = vmatprep.subr.mxu0 %v70
    %165 = vmatpush1.msra.mxu0 %v69
    %166 = vmatprep.subr.mxu0 %v68
    %167 = vmatpush1.msra.mxu0 %v67
    %168 = vmatprep.subr.mxu0 %v66
    %169 = vmatpush1.msra.mxu0 %v65
    %170 = vmatprep.subr.mxu0 %v64
    %171 = vmatpush1.msra.mxu0 %v63
    %172 = vmatprep.subr.mxu0 %v62
    %173 = vmatpush1.msra.mxu0 %v61
    %174 = vmatprep.subr.mxu0 %v60
    %175 = vmatpush1.msra.mxu0 %v59
    %176 = vmatprep.subr.mxu0 0.0
    %177 = vmatpush2.msra.mxu0 0.0
    %178 = vmatprep.subr.mxu0 0.0
    %179 = vmatpush2.msra.mxu0 0.0
    %180 = vmatprep.subr.mxu0 0.0
    %181 = vmatpush2.msra.mxu0 0.0
    %182 = vmatprep.subr.mxu0 0.0
    %183 = vmatpush2.msra.mxu0 0.0
    %184 = vmatprep.subr.mxu0 0.0
    %185 = vmatpush2.msra.mxu0 0.0
    %186 = vmatprep.subr.mxu0 0.0
    %187 = vmatpush2.msra.mxu0 0.0
    %188 = vmatprep.subr.mxu0 0.0
    %189 = vmatpush2.msra.mxu0 0.0
    %190 = vmatprep.subr.mxu0 0.0
    %191 = vmatpush2.msra.mxu0 0.0
    %192 = vmatprep.subr.mxu0 0.0
    %193 = vmatpush2.msra.mxu0 0.0
    %194 = vmatprep.subr.mxu0 0.0
    %195 = vmatpush2.msra.mxu0 0.0
    %196 = vmatprep.subr.mxu0 0.0
    %197 = vmatpush2.msra.mxu0 0.0
    %198 = vmatprep.subr.mxu0 0.0
    %199 = vmatpush2.msra.mxu0 0.0
    %200 = vmatprep.subr.mxu0 0.0
    %201 = vmatpush2.msra.mxu0 0.0
    %202 = vmatprep.subr.mxu0 0.0
    %203 = vmatpush2.msra.mxu0 0.0
    %204 = vmatprep.subr.mxu0 0.0
    %205 = vmatpush2.msra.mxu0 0.0
    %206 = vmatprep.subr.mxu0 0.0
    %207 = vmatpush2.msra.mxu0 0.0
    %208 = vmatprep.mubr.f32.mxu0 0.0
    %209 = vmatmul.mubr.f32.gmra.mxu0 %v97
    %v210 = vpop.f32.mrf.mxu0
    %v211 = vadd.f32 %v88, %v210
    %v212 = vpop.f32.mrf.mxu0
    %v213 = vadd.f32 %v92, %v212
    %214 = vmatprep.mubr.f32.mxu0 0.0
    %215 = vmatmul.mubr.f32.gmra.mxu0 %v100
    %v216 = vpop.f32.mrf.mxu0
    %v217 = vadd.f32 %v88, %v216
    %v218 = vpop.f32.mrf.mxu0
    %v219 = vadd.f32 %v92, %v218
    %220 = vmatprep.mubr.f32.mxu0 0.0
    %221 = vmatmul.mubr.f32.gmra.mxu0 %v103
    %v222 = vpop.f32.mrf.mxu0
    %v223 = vadd.f32 %v88, %v222
    %v224 = vpop.f32.mrf.mxu0
    %v225 = vadd.f32 %v92, %v224
    %226 = vmatprep.mubr.f32.mxu0 0.0
    %227 = vmatmul.mubr.f32.gmra.mxu0 %v106
    %v228 = vpop.f32.mrf.mxu0
    %v229 = vadd.f32 %v88, %v228
    %v230 = vpop.f32.mrf.mxu0
    %v231 = vadd.f32 %v92, %v230
    %232 = vmatprep.mubr.f32.mxu0 0.0
    %233 = vmatmul.mubr.f32.gmra.mxu0 %v109
    %v234 = vpop.f32.mrf.mxu0
    %v235 = vadd.f32 %v88, %v234
    %v236 = vpop.f32.mrf.mxu0
    %v237 = vadd.f32 %v92, %v236
    %238 = vmatprep.mubr.f32.mxu0 0.0
    %239 = vmatmul.mubr.f32.gmra.mxu0 %v112
    %v240 = vpop.f32.mrf.mxu0
    %v241 = vadd.f32 %v88, %v240
    %v242 = vpop.f32.mrf.mxu0
    %v243 = vadd.f32 %v92, %v242
    %244 = vmatprep.mubr.f32.mxu0 0.0
    %245 = vmatmul.mubr.f32.gmra.mxu0 %v115
    %v246 = vpop.f32.mrf.mxu0
    %v247 = vadd.f32 %v88, %v246
    %v248 = vpop.f32.mrf.mxu0
    %v249 = vadd.f32 %v92, %v248
    %250 = vmatprep.mubr.f32.mxu0 0.0
    %251 = vmatmul.mubr.f32.gmra.mxu0 %v118
    %v252 = vpop.f32.mrf.mxu0
    %v253 = vadd.f32 %v88, %v252
    %v254 = vpop.f32.mrf.mxu0
    %v255 = vadd.f32 %v92, %v254
    %256 = vmatprep.mubr.f32.mxu0 0.0
    %257 = vmatmul.mubr.f32.gmra.mxu0 %v121
    %v258 = vpop.f32.mrf.mxu0
    %v259 = vadd.f32 %v88, %v258
    %v260 = vpop.f32.mrf.mxu0
    %v261 = vadd.f32 %v92, %v260
    %262 = vmatprep.mubr.f32.mxu0 0.0
    %263 = vmatmul.mubr.f32.gmra.mxu0 %v124
    %v264 = vpop.f32.mrf.mxu0
    %v265 = vadd.f32 %v88, %v264
    %v266 = vpop.f32.mrf.mxu0
    %v267 = vadd.f32 %v92, %v266
    %268 = vmatprep.mubr.f32.mxu0 0.0
    %269 = vmatmul.mubr.f32.gmra.mxu0 %v127
    %v270 = vpop.f32.mrf.mxu0
    %v271 = vadd.f32 %v88, %v270
    %v272 = vpop.f32.mrf.mxu0
    %v273 = vadd.f32 %v92, %v272
    %274 = vmatprep.mubr.f32.mxu0 0.0
    %275 = vmatmul.mubr.f32.gmra.mxu0 %v130
    %v276 = vpop.f32.mrf.mxu0
    %v277 = vadd.f32 %v88, %v276
    %v278 = vpop.f32.mrf.mxu0
    %v279 = vadd.f32 %v92, %v278
    %280 = vmatprep.mubr.f32.mxu0 0.0
    %281 = vmatmul.mubr.f32.gmra.mxu0 %v133
    %v282 = vpop.f32.mrf.mxu0
    %v283 = vadd.f32 %v88, %v282
    %v284 = vpop.f32.mrf.mxu0
    %v285 = vadd.f32 %v92, %v284
    %286 = vmatprep.mubr.f32.mxu0 0.0
    %287 = vmatmul.mubr.f32.gmra.mxu0 %v136
    %v288 = vpop.f32.mrf.mxu0
    %v289 = vadd.f32 %v88, %v288
    %v290 = vpop.f32.mrf.mxu0
    %v291 = vadd.f32 %v92, %v290
    %292 = vmatprep.mubr.f32.mxu0 0.0
    %293 = vmatmul.mubr.f32.gmra.mxu0 %v139
    %v294 = vpop.f32.mrf.mxu0
    %v295 = vadd.f32 %v88, %v294
    %v296 = vpop.f32.mrf.mxu0
    %v297 = vadd.f32 %v92, %v296
    %298 = vmatprep.mubr.f32.mxu0 0.0
    %299 = vmatmul.mubr.f32.gmra.mxu0 %v142
    %v300 = vpop.f32.mrf.mxu0
    %v301 = vadd.f32 %v88, %v300
    %v302 = vpop.f32.mrf.mxu0
    %v303 = vadd.f32 %v92, %v302
    %304 = vdwg.mxu0
    %v305 = vld [vmem:[#allocation2] sm:$0xff]
    %v306 = vld [vmem:[#allocation2 + $0x8] sm:$0xff]
    %v307 = vld [vmem:[#allocation2 + $0x10] sm:$0xff]
    %v308 = vld [vmem:[#allocation2 + $0x18] sm:$0xff]
    %v309 = vld [vmem:[#allocation2 + $0x20] sm:$0xff]
    %v310 = vld [vmem:[#allocation2 + $0x28] sm:$0xff]
    %v311 = vld [vmem:[#allocation2 + $0x30] sm:$0xff]
    %v312 = vld [vmem:[#allocation2 + $0x38] sm:$0xff]
    %v313 = vld [vmem:[#allocation2 + $0x40] sm:$0xff]
    %v314 = vld [vmem:[#allocation2 + $0x48] sm:$0xff]
    %v315 = vld [vmem:[#allocation2 + $0x50] sm:$0xff]
    %v316 = vld [vmem:[#allocation2 + $0x58] sm:$0xff]
    %v317 = vld [vmem:[#allocation2 + $0x60] sm:$0xff]
    %v318 = vld [vmem:[#allocation2 + $0x68] sm:$0xff]
    %v319 = vld [vmem:[#allocation2 + $0x70] sm:$0xff]
    %v320 = vld [vmem:[#allocation2 + $0x78] sm:$0xff]
    %v321 = vld [vmem:[%s4] sm:$0xff]
    %v322 = vld [vmem:[%s5] sm:$0xff]
    %vm323 = vcmask 523264
    %v325 = vsel %vm323, %v321, 0
    %327 = vmatprep.subr.mxu0 0.0
    %328 = vmatpush1.msra.mxu0 0.0
    %329 = vmatprep.subr.mxu0 0.0
    %330 = vmatpush1.msra.mxu0 0.0
    %331 = vmatprep.subr.mxu0 0.0
    %332 = vmatpush1.msra.mxu0 0.0
    %333 = vmatprep.subr.mxu0 0.0
    %334 = vmatpush1.msra.mxu0 0.0
    %335 = vmatprep.subr.mxu0 0.0
    %336 = vmatpush1.msra.mxu0 0.0
    %337 = vmatprep.subr.mxu0 0.0
    %338 = vmatpush1.msra.mxu0 0.0
    %339 = vmatprep.subr.mxu0 0.0
    %340 = vmatpush1.msra.mxu0 0.0
    %341 = vmatprep.subr.mxu0 0.0
    %342 = vmatpush1.msra.mxu0 0.0
    %343 = vmatprep.subr.mxu0 %v320
    %344 = vmatpush1.msra.mxu0 %v319
    %345 = vmatprep.subr.mxu0 %v318
    %346 = vmatpush1.msra.mxu0 %v317
    %347 = vmatprep.subr.mxu0 %v316
    %348 = vmatpush1.msra.mxu0 %v315
    %349 = vmatprep.subr.mxu0 %v314
    %350 = vmatpush1.msra.mxu0 %v313
    %351 = vmatprep.subr.mxu0 %v312
    %352 = vmatpush1.msra.mxu0 %v311
    %353 = vmatprep.subr.mxu0 %v310
    %354 = vmatpush1.msra.mxu0 %v309
    %355 = vmatprep.subr.mxu0 %v308
    %356 = vmatpush1.msra.mxu0 %v307
    %357 = vmatprep.subr.mxu0 %v306
    %358 = vmatpush1.msra.mxu0 %v305
    %359 = vmatprep.subr.mxu0 0.0
    %360 = vmatpush2.msra.mxu0 0.0
    %361 = vmatprep.subr.mxu0 0.0
    %362 = vmatpush2.msra.mxu0 0.0
    %363 = vmatprep.subr.mxu0 0.0
    %364 = vmatpush2.msra.mxu0 0.0
    %365 = vmatprep.subr.mxu0 0.0
    %366 = vmatpush2.msra.mxu0 0.0
    %367 = vmatprep.subr.mxu0 0.0
    %368 = vmatpush2.msra.mxu0 0.0
    %369 = vmatprep.subr.mxu0 0.0
    %370 = vmatpush2.msra.mxu0 0.0
    %371 = vmatprep.subr.mxu0 0.0
    %372 = vmatpush2.msra.mxu0 0.0
    %373 = vmatprep.subr.mxu0 0.0
    %374 = vmatpush2.msra.mxu0 0.0
    %375 = vmatprep.subr.mxu0 0.0
    %376 = vmatpush2.msra.mxu0 0.0
    %377 = vmatprep.subr.mxu0 0.0
    %378 = vmatpush2.msra.mxu0 0.0
    %379 = vmatprep.subr.mxu0 0.0
    %380 = vmatpush2.msra.mxu0 0.0
    %381 = vmatprep.subr.mxu0 0.0
    %382 = vmatpush2.msra.mxu0 0.0
    %383 = vmatprep.subr.mxu0 0.0
    %384 = vmatpush2.msra.mxu0 0.0
    %385 = vmatprep.subr.mxu0 0.0
    %386 = vmatpush2.msra.mxu0 0.0
    %387 = vmatprep.subr.mxu0 0.0
    %388 = vmatpush2.msra.mxu0 0.0
    %389 = vmatprep.subr.mxu0 0.0
    %390 = vmatpush2.msra.mxu0 0.0
    %391 = vmatprep.mubr.f32.mxu0 0.0
    %392 = vmatmul.mubr.f32.gmra.mxu0 %v325
    %v393 = vpop.f32.mrf.mxu0
    %v394 = vadd.f32 0.0, %v393
    %v395 = vpop.f32.mrf.mxu0
    %v396 = vadd.f32 0.0, %v395
    %397 = vdwg.mxu0
    %v398 = vadd.f32 %v211, %v394
    %v399 = vadd.f32 %v213, %v396
    %v400 = vxor.u32 %v398, 2147483648
    %v401 = vxor.u32 %v399, 2147483648
    %v402 = vmul.f32 %v400, 1.442695
    %v403 = vpow.pop %v402
    %v404 = vmul.f32 %v401, 1.442695
    %v405 = vpow.pop %v404
    %v406 = vadd.f32 %v403, 1.0
    %v407 = vadd.f32 %v405, 1.0
    %v408 = vrcp.pop %v406
    %v409 = vmul.f32 1.0, %v408
    %v410 = vrcp.pop %v407
    %v411 = vmul.f32 1.0, %v410
    %v412 = vtanh.pop %v399
    %414 = vrot.lane.b32.xlu0 %v322, 64
    %v415 = vpop.permute.xlu0 %414
    %v417 = vmul.f32 %v409, %v415
    %419 = vrot.lane.b32.xlu0 %v412, 64
    %v420 = vpop.permute.xlu0 %419
    %v422 = vmul.f32 %v409, %v420
    %424 = vrot.lane.b32.xlu0 %v422, 64
    %v425 = vpop.permute.xlu0 %424
    %v427 = vadd.f32 %v417, %v425
    %v428 = vtanh.pop %v427
    %430 = vrot.lane.b32.xlu0 %v428, 64
    %v431 = vpop.permute.xlu0 %430
    %v433 = vmul.f32 %v411, %v431
    %v434 = vadd.f32 %v433, 0.0
    %v436 = vsel %vm323, %v433, 0
    %438 = vmatprep.subr.mxu0 0.0
    %439 = vmatpush1.msra.mxu0 0.0
    %440 = vmatprep.subr.mxu0 0.0
    %441 = vmatpush1.msra.mxu0 0.0
    %442 = vmatprep.subr.mxu0 0.0
    %443 = vmatpush1.msra.mxu0 0.0
    %444 = vmatprep.subr.mxu0 0.0
    %445 = vmatpush1.msra.mxu0 0.0
    %446 = vmatprep.subr.mxu0 0.0
    %447 = vmatpush1.msra.mxu0 0.0
    %448 = vmatprep.subr.mxu0 0.0
    %449 = vmatpush1.msra.mxu0 0.0
    %450 = vmatprep.subr.mxu0 0.0
    %451 = vmatpush1.msra.mxu0 0.0
    %452 = vmatprep.subr.mxu0 0.0
    %453 = vmatpush1.msra.mxu0 0.0
    %454 = vmatprep.subr.mxu0 %v320
    %455 = vmatpush1.msra.mxu0 %v319
    %456 = vmatprep.subr.mxu0 %v318
    %457 = vmatpush1.msra.mxu0 %v317
    %458 = vmatprep.subr.mxu0 %v316
    %459 = vmatpush1.msra.mxu0 %v315
    %460 = vmatprep.subr.mxu0 %v314
    %461 = vmatpush1.msra.mxu0 %v313
    %462 = vmatprep.subr.mxu0 %v312
    %463 = vmatpush1.msra.mxu0 %v311
    %464 = vmatprep.subr.mxu0 %v310
    %465 = vmatpush1.msra.mxu0 %v309
    %466 = vmatprep.subr.mxu0 %v308
    %467 = vmatpush1.msra.mxu0 %v307
    %468 = vmatprep.subr.mxu0 %v306
    %469 = vmatpush1.msra.mxu0 %v305
    %470 = vmatprep.subr.mxu0 0.0
    %471 = vmatpush2.msra.mxu0 0.0
    %472 = vmatprep.subr.mxu0 0.0
    %473 = vmatpush2.msra.mxu0 0.0
    %474 = vmatprep.subr.mxu0 0.0
    %475 = vmatpush2.msra.mxu0 0.0
    %476 = vmatprep.subr.mxu0 0.0
    %477 = vmatpush2.msra.mxu0 0.0
    %478 = vmatprep.subr.mxu0 0.0
    %479 = vmatpush2.msra.mxu0 0.0
    %480 = vmatprep.subr.mxu0 0.0
    %481 = vmatpush2.msra.mxu0 0.0
    %482 = vmatprep.subr.mxu0 0.0
    %483 = vmatpush2.msra.mxu0 0.0
    %484 = vmatprep.subr.mxu0 0.0
    %485 = vmatpush2.msra.mxu0 0.0
    %486 = vmatprep.subr.mxu0 0.0
    %487 = vmatpush2.msra.mxu0 0.0
    %488 = vmatprep.subr.mxu0 0.0
    %489 = vmatpush2.msra.mxu0 0.0
    %490 = vmatprep.subr.mxu0 0.0
    %491 = vmatpush2.msra.mxu0 0.0
    %492 = vmatprep.subr.mxu0 0.0
    %493 = vmatpush2.msra.mxu0 0.0
    %494 = vmatprep.subr.mxu0 0.0
    %495 = vmatpush2.msra.mxu0 0.0
    %496 = vmatprep.subr.mxu0 0.0
    %497 = vmatpush2.msra.mxu0 0.0
    %498 = vmatprep.subr.mxu0 0.0
    %499 = vmatpush2.msra.mxu0 0.0
    %500 = vmatprep.subr.mxu0 0.0
    %501 = vmatpush2.msra.mxu0 0.0
    %502 = vmatprep.mubr.f32.mxu0 0.0
    %503 = vmatmul.mubr.f32.gmra.mxu0 %v436
    %v504 = vpop.f32.mrf.mxu0
    %v505 = vadd.f32 0.0, %v504
    %v506 = vpop.f32.mrf.mxu0
    %v507 = vadd.f32 0.0, %v506
    %508 = vdwg.mxu0
    %v509 = vadd.f32 %v217, %v505
    %v510 = vadd.f32 %v219, %v507
    %v511 = vxor.u32 %v509, 2147483648
    %v512 = vxor.u32 %v510, 2147483648
    %v513 = vmul.f32 %v511, 1.442695
    %v514 = vpow.pop %v513
    %v515 = vmul.f32 %v512, 1.442695
    %v516 = vpow.pop %v515
    %v517 = vadd.f32 %v514, 1.0
    %v518 = vadd.f32 %v516, 1.0
    %v519 = vrcp.pop %v517
    %v520 = vmul.f32 1.0, %v519
    %v521 = vrcp.pop %v518
    %v522 = vmul.f32 1.0, %v521
    %v523 = vtanh.pop %v510
    %v524 = vmul.f32 %v520, %v427
    %526 = vrot.lane.b32.xlu0 %v523, 64
    %v527 = vpop.permute.xlu0 %526
    %v529 = vmul.f32 %v520, %v527
    %531 = vrot.lane.b32.xlu0 %v529, 64
    %v532 = vpop.permute.xlu0 %531
    %v534 = vadd.f32 %v524, %v532
    %v535 = vtanh.pop %v534
    %537 = vrot.lane.b32.xlu0 %v535, 64
    %v538 = vpop.permute.xlu0 %537
    %v540 = vmul.f32 %v522, %v538
    %v541 = vadd.f32 %v434, %v540
    %v543 = vsel %vm323, %v540, 0
    %545 = vmatprep.subr.mxu0 0.0
    %546 = vmatpush1.msra.mxu0 0.0
    %547 = vmatprep.subr.mxu0 0.0
    %548 = vmatpush1.msra.mxu0 0.0
    %549 = vmatprep.subr.mxu0 0.0
    %550 = vmatpush1.msra.mxu0 0.0
    %551 = vmatprep.subr.mxu0 0.0
    %552 = vmatpush1.msra.mxu0 0.0
    %553 = vmatprep.subr.mxu0 0.0
    %554 = vmatpush1.msra.mxu0 0.0
    %555 = vmatprep.subr.mxu0 0.0
    %556 = vmatpush1.msra.mxu0 0.0
    %557 = vmatprep.subr.mxu0 0.0
    %558 = vmatpush1.msra.mxu0 0.0
    %559 = vmatprep.subr.mxu0 0.0
    %560 = vmatpush1.msra.mxu0 0.0
    %561 = vmatprep.subr.mxu0 %v320
    %562 = vmatpush1.msra.mxu0 %v319
    %563 = vmatprep.subr.mxu0 %v318
    %564 = vmatpush1.msra.mxu0 %v317
    %565 = vmatprep.subr.mxu0 %v316
    %566 = vmatpush1.msra.mxu0 %v315
    %567 = vmatprep.subr.mxu0 %v314
    %568 = vmatpush1.msra.mxu0 %v313
    %569 = vmatprep.subr.mxu0 %v312
    %570 = vmatpush1.msra.mxu0 %v311
    %571 = vmatprep.subr.mxu0 %v310
    %572 = vmatpush1.msra.mxu0 %v309
    %573 = vmatprep.subr.mxu0 %v308
    %574 = vmatpush1.msra.mxu0 %v307
    %575 = vmatprep.subr.mxu0 %v306
    %576 = vmatpush1.msra.mxu0 %v305
    %577 = vmatprep.subr.mxu0 0.0
    %578 = vmatpush2.msra.mxu0 0.0
    %579 = vmatprep.subr.mxu0 0.0
    %580 = vmatpush2.msra.mxu0 0.0
    %581 = vmatprep.subr.mxu0 0.0
    %582 = vmatpush2.msra.mxu0 0.0
    %583 = vmatprep.subr.mxu0 0.0
    %584 = vmatpush2.msra.mxu0 0.0
    %585 = vmatprep.subr.mxu0 0.0
    %586 = vmatpush2.msra.mxu0 0.0
    %587 = vmatprep.subr.mxu0 0.0
    %588 = vmatpush2.msra.mxu0 0.0
    %589 = vmatprep.subr.mxu0 0.0
    %590 = vmatpush2.msra.mxu0 0.0
    %591 = vmatprep.subr.mxu0 0.0
    %592 = vmatpush2.msra.mxu0 0.0
    %593 = vmatprep.subr.mxu0 0.0
    %594 = vmatpush2.msra.mxu0 0.0
    %595 = vmatprep.subr.mxu0 0.0
    %596 = vmatpush2.msra.mxu0 0.0
    %597 = vmatprep.subr.mxu0 0.0
    %598 = vmatpush2.msra.mxu0 0.0
    %599 = vmatprep.subr.mxu0 0.0
    %600 = vmatpush2.msra.mxu0 0.0
    %601 = vmatprep.subr.mxu0 0.0
    %602 = vmatpush2.msra.mxu0 0.0
    %603 = vmatprep.subr.mxu0 0.0
    %604 = vmatpush2.msra.mxu0 0.0
    %605 = vmatprep.subr.mxu0 0.0
    %606 = vmatpush2.msra.mxu0 0.0
    %607 = vmatprep.subr.mxu0 0.0
    %608 = vmatpush2.msra.mxu0 0.0
    %609 = vmatprep.mubr.f32.mxu0 0.0
    %610 = vmatmul.mubr.f32.gmra.mxu0 %v543
    %v611 = vpop.f32.mrf.mxu0
    %v612 = vadd.f32 0.0, %v611
    %v613 = vpop.f32.mrf.mxu0
    %v614 = vadd.f32 0.0, %v613
    %615 = vdwg.mxu0
    %v616 = vadd.f32 %v223, %v612
    %v617 = vadd.f32 %v225, %v614
    %v618 = vxor.u32 %v616, 2147483648
    %v619 = vxor.u32 %v617, 2147483648
    %v620 = vmul.f32 %v618, 1.442695
    %v621 = vpow.pop %v620
    %v622 = vmul.f32 %v619, 1.442695
    %v623 = vpow.pop %v622
    %v624 = vadd.f32 %v621, 1.0
    %v625 = vadd.f32 %v623, 1.0
    %v626 = vrcp.pop %v624
    %v627 = vmul.f32 1.0, %v626
    %v628 = vrcp.pop %v625
    %v629 = vmul.f32 1.0, %v628
    %v630 = vtanh.pop %v617
    %v631 = vmul.f32 %v627, %v534
    %633 = vrot.lane.b32.xlu0 %v630, 64
    %v634 = vpop.permute.xlu0 %633
    %v636 = vmul.f32 %v627, %v634
    %638 = vrot.lane.b32.xlu0 %v636, 64
    %v639 = vpop.permute.xlu0 %638
    %v641 = vadd.f32 %v631, %v639
    %v642 = vtanh.pop %v641
    %644 = vrot.lane.b32.xlu0 %v642, 64
    %v645 = vpop.permute.xlu0 %644
    %v647 = vmul.f32 %v629, %v645
    %v648 = vadd.f32 %v541, %v647
    %v650 = vsel %vm323, %v647, 0
    %652 = vmatprep.subr.mxu0 0.0
    %653 = vmatpush1.msra.mxu0 0.0
    %654 = vmatprep.subr.mxu0 0.0
    %655 = vmatpush1.msra.mxu0 0.0
    %656 = vmatprep.subr.mxu0 0.0
    %657 = vmatpush1.msra.mxu0 0.0
    %658 = vmatprep.subr.mxu0 0.0
    %659 = vmatpush1.msra.mxu0 0.0
    %660 = vmatprep.subr.mxu0 0.0
    %661 = vmatpush1.msra.mxu0 0.0
    %662 = vmatprep.subr.mxu0 0.0
    %663 = vmatpush1.msra.mxu0 0.0
    %664 = vmatprep.subr.mxu0 0.0
    %665 = vmatpush1.msra.mxu0 0.0
    %666 = vmatprep.subr.mxu0 0.0
    %667 = vmatpush1.msra.mxu0 0.0
    %668 = vmatprep.subr.mxu0 %v320
    %669 = vmatpush1.msra.mxu0 %v319
    %670 = vmatprep.subr.mxu0 %v318
    %671 = vmatpush1.msra.mxu0 %v317
    %672 = vmatprep.subr.mxu0 %v316
    %673 = vmatpush1.msra.mxu0 %v315
    %674 = vmatprep.subr.mxu0 %v314
    %675 = vmatpush1.msra.mxu0 %v313
    %676 = vmatprep.subr.mxu0 %v312
    %677 = vmatpush1.msra.mxu0 %v311
    %678 = vmatprep.subr.mxu0 %v310
    %679 = vmatpush1.msra.mxu0 %v309
    %680 = vmatprep.subr.mxu0 %v308
    %681 = vmatpush1.msra.mxu0 %v307
    %682 = vmatprep.subr.mxu0 %v306
    %683 = vmatpush1.msra.mxu0 %v305
    %684 = vmatprep.subr.mxu0 0.0
    %685 = vmatpush2.msra.mxu0 0.0
    %686 = vmatprep.subr.mxu0 0.0
    %687 = vmatpush2.msra.mxu0 0.0
    %688 = vmatprep.subr.mxu0 0.0
    %689 = vmatpush2.msra.mxu0 0.0
    %690 = vmatprep.subr.mxu0 0.0
    %691 = vmatpush2.msra.mxu0 0.0
    %692 = vmatprep.subr.mxu0 0.0
    %693 = vmatpush2.msra.mxu0 0.0
    %694 = vmatprep.subr.mxu0 0.0
    %695 = vmatpush2.msra.mxu0 0.0
    %696 = vmatprep.subr.mxu0 0.0
    %697 = vmatpush2.msra.mxu0 0.0
    %698 = vmatprep.subr.mxu0 0.0
    %699 = vmatpush2.msra.mxu0 0.0
    %700 = vmatprep.subr.mxu0 0.0
    %701 = vmatpush2.msra.mxu0 0.0
    %702 = vmatprep.subr.mxu0 0.0
    %703 = vmatpush2.msra.mxu0 0.0
    %704 = vmatprep.subr.mxu0 0.0
    %705 = vmatpush2.msra.mxu0 0.0
    %706 = vmatprep.subr.mxu0 0.0
    %707 = vmatpush2.msra.mxu0 0.0
    %708 = vmatprep.subr.mxu0 0.0
    %709 = vmatpush2.msra.mxu0 0.0
    %710 = vmatprep.subr.mxu0 0.0
    %711 = vmatpush2.msra.mxu0 0.0
    %712 = vmatprep.subr.mxu0 0.0
    %713 = vmatpush2.msra.mxu0 0.0
    %714 = vmatprep.subr.mxu0 0.0
    %715 = vmatpush2.msra.mxu0 0.0
    %716 = vmatprep.mubr.f32.mxu0 0.0
    %717 = vmatmul.mubr.f32.gmra.mxu0 %v650
    %v718 = vpop.f32.mrf.mxu0
    %v719 = vadd.f32 0.0, %v718
    %v720 = vpop.f32.mrf.mxu0
    %v721 = vadd.f32 0.0, %v720
    %722 = vdwg.mxu0
    %v723 = vadd.f32 %v229, %v719
    %v724 = vadd.f32 %v231, %v721
    %v725 = vxor.u32 %v723, 2147483648
    %v726 = vxor.u32 %v724, 2147483648
    %v727 = vmul.f32 %v725, 1.442695
    %v728 = vpow.pop %v727
    %v729 = vmul.f32 %v726, 1.442695
    %v730 = vpow.pop %v729
    %v731 = vadd.f32 %v728, 1.0
    %v732 = vadd.f32 %v730, 1.0
    %v733 = vrcp.pop %v731
    %v734 = vmul.f32 1.0, %v733
    %v735 = vrcp.pop %v732
    %v736 = vmul.f32 1.0, %v735
    %v737 = vtanh.pop %v724
    %v738 = vmul.f32 %v734, %v641
    %740 = vrot.lane.b32.xlu0 %v737, 64
    %v741 = vpop.permute.xlu0 %740
    %v743 = vmul.f32 %v734, %v741
    %745 = vrot.lane.b32.xlu0 %v743, 64
    %v746 = vpop.permute.xlu0 %745
    %v748 = vadd.f32 %v738, %v746
    %v749 = vtanh.pop %v748
    %751 = vrot.lane.b32.xlu0 %v749, 64
    %v752 = vpop.permute.xlu0 %751
    %v754 = vmul.f32 %v736, %v752
    %v755 = vadd.f32 %v648, %v754
    %v757 = vsel %vm323, %v754, 0
    %759 = vmatprep.subr.mxu0 0.0
    %760 = vmatpush1.msra.mxu0 0.0
    %761 = vmatprep.subr.mxu0 0.0
    %762 = vmatpush1.msra.mxu0 0.0
    %763 = vmatprep.subr.mxu0 0.0
    %764 = vmatpush1.msra.mxu0 0.0
    %765 = vmatprep.subr.mxu0 0.0
    %766 = vmatpush1.msra.mxu0 0.0
    %767 = vmatprep.subr.mxu0 0.0
    %768 = vmatpush1.msra.mxu0 0.0
    %769 = vmatprep.subr.mxu0 0.0
    %770 = vmatpush1.msra.mxu0 0.0
    %771 = vmatprep.subr.mxu0 0.0
    %772 = vmatpush1.msra.mxu0 0.0
    %773 = vmatprep.subr.mxu0 0.0
    %774 = vmatpush1.msra.mxu0 0.0
    %775 = vmatprep.subr.mxu0 %v320
    %776 = vmatpush1.msra.mxu0 %v319
    %777 = vmatprep.subr.mxu0 %v318
    %778 = vmatpush1.msra.mxu0 %v317
    %779 = vmatprep.subr.mxu0 %v316
    %780 = vmatpush1.msra.mxu0 %v315
    %781 = vmatprep.subr.mxu0 %v314
    %782 = vmatpush1.msra.mxu0 %v313
    %783 = vmatprep.subr.mxu0 %v312
    %784 = vmatpush1.msra.mxu0 %v311
    %785 = vmatprep.subr.mxu0 %v310
    %786 = vmatpush1.msra.mxu0 %v309
    %787 = vmatprep.subr.mxu0 %v308
    %788 = vmatpush1.msra.mxu0 %v307
    %789 = vmatprep.subr.mxu0 %v306
    %790 = vmatpush1.msra.mxu0 %v305
    %791 = vmatprep.subr.mxu0 0.0
    %792 = vmatpush2.msra.mxu0 0.0
    %793 = vmatprep.subr.mxu0 0.0
    %794 = vmatpush2.msra.mxu0 0.0
    %795 = vmatprep.subr.mxu0 0.0
    %796 = vmatpush2.msra.mxu0 0.0
    %797 = vmatprep.subr.mxu0 0.0
    %798 = vmatpush2.msra.mxu0 0.0
    %799 = vmatprep.subr.mxu0 0.0
    %800 = vmatpush2.msra.mxu0 0.0
    %801 = vmatprep.subr.mxu0 0.0
    %802 = vmatpush2.msra.mxu0 0.0
    %803 = vmatprep.subr.mxu0 0.0
    %804 = vmatpush2.msra.mxu0 0.0
    %805 = vmatprep.subr.mxu0 0.0
    %806 = vmatpush2.msra.mxu0 0.0
    %807 = vmatprep.subr.mxu0 0.0
    %808 = vmatpush2.msra.mxu0 0.0
    %809 = vmatprep.subr.mxu0 0.0
    %810 = vmatpush2.msra.mxu0 0.0
    %811 = vmatprep.subr.mxu0 0.0
    %812 = vmatpush2.msra.mxu0 0.0
    %813 = vmatprep.subr.mxu0 0.0
    %814 = vmatpush2.msra.mxu0 0.0
    %815 = vmatprep.subr.mxu0 0.0
    %816 = vmatpush2.msra.mxu0 0.0
    %817 = vmatprep.subr.mxu0 0.0
    %818 = vmatpush2.msra.mxu0 0.0
    %819 = vmatprep.subr.mxu0 0.0
    %820 = vmatpush2.msra.mxu0 0.0
    %821 = vmatprep.subr.mxu0 0.0
    %822 = vmatpush2.msra.mxu0 0.0
    %823 = vmatprep.mubr.f32.mxu0 0.0
    %824 = vmatmul.mubr.f32.gmra.mxu0 %v757
    %v825 = vpop.f32.mrf.mxu0
    %v826 = vadd.f32 0.0, %v825
    %v827 = vpop.f32.mrf.mxu0
    %v828 = vadd.f32 0.0, %v827
    %829 = vdwg.mxu0
    %v830 = vadd.f32 %v235, %v826
    %v831 = vadd.f32 %v237, %v828
    %v832 = vxor.u32 %v830, 2147483648
    %v833 = vxor.u32 %v831, 2147483648
    %v834 = vmul.f32 %v832, 1.442695
    %v835 = vpow.pop %v834
    %v836 = vmul.f32 %v833, 1.442695
    %v837 = vpow.pop %v836
    %v838 = vadd.f32 %v835, 1.0
    %v839 = vadd.f32 %v837, 1.0
    %v840 = vrcp.pop %v838
    %v841 = vmul.f32 1.0, %v840
    %v842 = vrcp.pop %v839
    %v843 = vmul.f32 1.0, %v842
    %v844 = vtanh.pop %v831
    %v845 = vmul.f32 %v841, %v748
    %847 = vrot.lane.b32.xlu0 %v844, 64
    %v848 = vpop.permute.xlu0 %847
    %v850 = vmul.f32 %v841, %v848
    %852 = vrot.lane.b32.xlu0 %v850, 64
    %v853 = vpop.permute.xlu0 %852
    %v855 = vadd.f32 %v845, %v853
    %v856 = vtanh.pop %v855
    %858 = vrot.lane.b32.xlu0 %v856, 64
    %v859 = vpop.permute.xlu0 %858
    %v861 = vmul.f32 %v843, %v859
    %v862 = vadd.f32 %v755, %v861
    %v864 = vsel %vm323, %v861, 0
    %866 = vmatprep.subr.mxu0 0.0
    %867 = vmatpush1.msra.mxu0 0.0
    %868 = vmatprep.subr.mxu0 0.0
    %869 = vmatpush1.msra.mxu0 0.0
    %870 = vmatprep.subr.mxu0 0.0
    %871 = vmatpush1.msra.mxu0 0.0
    %872 = vmatprep.subr.mxu0 0.0
    %873 = vmatpush1.msra.mxu0 0.0
    %874 = vmatprep.subr.mxu0 0.0
    %875 = vmatpush1.msra.mxu0 0.0
    %876 = vmatprep.subr.mxu0 0.0
    %877 = vmatpush1.msra.mxu0 0.0
    %878 = vmatprep.subr.mxu0 0.0
    %879 = vmatpush1.msra.mxu0 0.0
    %880 = vmatprep.subr.mxu0 0.0
    %881 = vmatpush1.msra.mxu0 0.0
    %882 = vmatprep.subr.mxu0 %v320
    %883 = vmatpush1.msra.mxu0 %v319
    %884 = vmatprep.subr.mxu0 %v318
    %885 = vmatpush1.msra.mxu0 %v317
    %886 = vmatprep.subr.mxu0 %v316
    %887 = vmatpush1.msra.mxu0 %v315
    %888 = vmatprep.subr.mxu0 %v314
    %889 = vmatpush1.msra.mxu0 %v313
    %890 = vmatprep.subr.mxu0 %v312
    %891 = vmatpush1.msra.mxu0 %v311
    %892 = vmatprep.subr.mxu0 %v310
    %893 = vmatpush1.msra.mxu0 %v309
    %894 = vmatprep.subr.mxu0 %v308
    %895 = vmatpush1.msra.mxu0 %v307
    %896 = vmatprep.subr.mxu0 %v306
    %897 = vmatpush1.msra.mxu0 %v305
    %898 = vmatprep.subr.mxu0 0.0
    %899 = vmatpush2.msra.mxu0 0.0
    %900 = vmatprep.subr.mxu0 0.0
    %901 = vmatpush2.msra.mxu0 0.0
    %902 = vmatprep.subr.mxu0 0.0
    %903 = vmatpush2.msra.mxu0 0.0
    %904 = vmatprep.subr.mxu0 0.0
    %905 = vmatpush2.msra.mxu0 0.0
    %906 = vmatprep.subr.mxu0 0.0
    %907 = vmatpush2.msra.mxu0 0.0
    %908 = vmatprep.subr.mxu0 0.0
    %909 = vmatpush2.msra.mxu0 0.0
    %910 = vmatprep.subr.mxu0 0.0
    %911 = vmatpush2.msra.mxu0 0.0
    %912 = vmatprep.subr.mxu0 0.0
    %913 = vmatpush2.msra.mxu0 0.0
    %914 = vmatprep.subr.mxu0 0.0
    %915 = vmatpush2.msra.mxu0 0.0
    %916 = vmatprep.subr.mxu0 0.0
    %917 = vmatpush2.msra.mxu0 0.0
    %918 = vmatprep.subr.mxu0 0.0
    %919 = vmatpush2.msra.mxu0 0.0
    %920 = vmatprep.subr.mxu0 0.0
    %921 = vmatpush2.msra.mxu0 0.0
    %922 = vmatprep.subr.mxu0 0.0
    %923 = vmatpush2.msra.mxu0 0.0
    %924 = vmatprep.subr.mxu0 0.0
    %925 = vmatpush2.msra.mxu0 0.0
    %926 = vmatprep.subr.mxu0 0.0
    %927 = vmatpush2.msra.mxu0 0.0
    %928 = vmatprep.subr.mxu0 0.0
    %929 = vmatpush2.msra.mxu0 0.0
    %930 = vmatprep.mubr.f32.mxu0 0.0
    %931 = vmatmul.mubr.f32.gmra.mxu0 %v864
    %v932 = vpop.f32.mrf.mxu0
    %v933 = vadd.f32 0.0, %v932
    %v934 = vpop.f32.mrf.mxu0
    %v935 = vadd.f32 0.0, %v934
    %936 = vdwg.mxu0
    %v937 = vadd.f32 %v241, %v933
    %v938 = vadd.f32 %v243, %v935
    %v939 = vxor.u32 %v937, 2147483648
    %v940 = vxor.u32 %v938, 2147483648
    %v941 = vmul.f32 %v939, 1.442695
    %v942 = vpow.pop %v941
    %v943 = vmul.f32 %v940, 1.442695
    %v944 = vpow.pop %v943
    %v945 = vadd.f32 %v942, 1.0
    %v946 = vadd.f32 %v944, 1.0
    %v947 = vrcp.pop %v945
    %v948 = vmul.f32 1.0, %v947
    %v949 = vrcp.pop %v946
    %v950 = vmul.f32 1.0, %v949
    %v951 = vtanh.pop %v938
    %v952 = vmul.f32 %v948, %v855
    %954 = vrot.lane.b32.xlu0 %v951, 64
    %v955 = vpop.permute.xlu0 %954
    %v957 = vmul.f32 %v948, %v955
    %959 = vrot.lane.b32.xlu0 %v957, 64
    %v960 = vpop.permute.xlu0 %959
    %v962 = vadd.f32 %v952, %v960
    %v963 = vtanh.pop %v962
    %965 = vrot.lane.b32.xlu0 %v963, 64
    %v966 = vpop.permute.xlu0 %965
    %v968 = vmul.f32 %v950, %v966
    %v969 = vadd.f32 %v862, %v968
    %v971 = vsel %vm323, %v968, 0
    %973 = vmatprep.subr.mxu0 0.0
    %974 = vmatpush1.msra.mxu0 0.0
    %975 = vmatprep.subr.mxu0 0.0
    %976 = vmatpush1.msra.mxu0 0.0
    %977 = vmatprep.subr.mxu0 0.0
    %978 = vmatpush1.msra.mxu0 0.0
    %979 = vmatprep.subr.mxu0 0.0
    %980 = vmatpush1.msra.mxu0 0.0
    %981 = vmatprep.subr.mxu0 0.0
    %982 = vmatpush1.msra.mxu0 0.0
    %983 = vmatprep.subr.mxu0 0.0
    %984 = vmatpush1.msra.mxu0 0.0
    %985 = vmatprep.subr.mxu0 0.0
    %986 = vmatpush1.msra.mxu0 0.0
    %987 = vmatprep.subr.mxu0 0.0
    %988 = vmatpush1.msra.mxu0 0.0
    %989 = vmatprep.subr.mxu0 %v320
    %990 = vmatpush1.msra.mxu0 %v319
    %991 = vmatprep.subr.mxu0 %v318
    %992 = vmatpush1.msra.mxu0 %v317
    %993 = vmatprep.subr.mxu0 %v316
    %994 = vmatpush1.msra.mxu0 %v315
    %995 = vmatprep.subr.mxu0 %v314
    %996 = vmatpush1.msra.mxu0 %v313
    %997 = vmatprep.subr.mxu0 %v312
    %998 = vmatpush1.msra.mxu0 %v311
    %999 = vmatprep.subr.mxu0 %v310
    %1000 = vmatpush1.msra.mxu0 %v309
    %1001 = vmatprep.subr.mxu0 %v308
    %1002 = vmatpush1.msra.mxu0 %v307
    %1003 = vmatprep.subr.mxu0 %v306
    %1004 = vmatpush1.msra.mxu0 %v305
    %1005 = vmatprep.subr.mxu0 0.0
    %1006 = vmatpush2.msra.mxu0 0.0
    %1007 = vmatprep.subr.mxu0 0.0
    %1008 = vmatpush2.msra.mxu0 0.0
    %1009 = vmatprep.subr.mxu0 0.0
    %1010 = vmatpush2.msra.mxu0 0.0
    %1011 = vmatprep.subr.mxu0 0.0
    %1012 = vmatpush2.msra.mxu0 0.0
    %1013 = vmatprep.subr.mxu0 0.0
    %1014 = vmatpush2.msra.mxu0 0.0
    %1015 = vmatprep.subr.mxu0 0.0
    %1016 = vmatpush2.msra.mxu0 0.0
    %1017 = vmatprep.subr.mxu0 0.0
    %1018 = vmatpush2.msra.mxu0 0.0
    %1019 = vmatprep.subr.mxu0 0.0
    %1020 = vmatpush2.msra.mxu0 0.0
    %1021 = vmatprep.subr.mxu0 0.0
    %1022 = vmatpush2.msra.mxu0 0.0
    %1023 = vmatprep.subr.mxu0 0.0
    %1024 = vmatpush2.msra.mxu0 0.0
    %1025 = vmatprep.subr.mxu0 0.0
    %1026 = vmatpush2.msra.mxu0 0.0
    %1027 = vmatprep.subr.mxu0 0.0
    %1028 = vmatpush2.msra.mxu0 0.0
    %1029 = vmatprep.subr.mxu0 0.0
    %1030 = vmatpush2.msra.mxu0 0.0
    %1031 = vmatprep.subr.mxu0 0.0
    %1032 = vmatpush2.msra.mxu0 0.0
    %1033 = vmatprep.subr.mxu0 0.0
    %1034 = vmatpush2.msra.mxu0 0.0
    %1035 = vmatprep.subr.mxu0 0.0
    %1036 = vmatpush2.msra.mxu0 0.0
    %1037 = vmatprep.mubr.f32.mxu0 0.0
    %1038 = vmatmul.mubr.f32.gmra.mxu0 %v971
    %v1039 = vpop.f32.mrf.mxu0
    %v1040 = vadd.f32 0.0, %v1039
    %v1041 = vpop.f32.mrf.mxu0
    %v1042 = vadd.f32 0.0, %v1041
    %1043 = vdwg.mxu0
    %v1044 = vadd.f32 %v247, %v1040
    %v1045 = vadd.f32 %v249, %v1042
    %v1046 = vxor.u32 %v1044, 2147483648
    %v1047 = vxor.u32 %v1045, 2147483648
    %v1048 = vmul.f32 %v1046, 1.442695
    %v1049 = vpow.pop %v1048
    %v1050 = vmul.f32 %v1047, 1.442695
    %v1051 = vpow.pop %v1050
    %v1052 = vadd.f32 %v1049, 1.0
    %v1053 = vadd.f32 %v1051, 1.0
    %v1054 = vrcp.pop %v1052
    %v1055 = vmul.f32 1.0, %v1054
    %v1056 = vrcp.pop %v1053
    %v1057 = vmul.f32 1.0, %v1056
    %v1058 = vtanh.pop %v1045
    %v1059 = vmul.f32 %v1055, %v962
    %1061 = vrot.lane.b32.xlu0 %v1058, 64
    %v1062 = vpop.permute.xlu0 %1061
    %v1064 = vmul.f32 %v1055, %v1062
    %1066 = vrot.lane.b32.xlu0 %v1064, 64
    %v1067 = vpop.permute.xlu0 %1066
    %v1069 = vadd.f32 %v1059, %v1067
    %v1070 = vtanh.pop %v1069
    %1072 = vrot.lane.b32.xlu0 %v1070, 64
    %v1073 = vpop.permute.xlu0 %1072
    %v1075 = vmul.f32 %v1057, %v1073
    %v1076 = vadd.f32 %v969, %v1075
    %v1078 = vsel %vm323, %v1075, 0
    %1080 = vmatprep.subr.mxu0 0.0
    %1081 = vmatpush1.msra.mxu0 0.0
    %1082 = vmatprep.subr.mxu0 0.0
    %1083 = vmatpush1.msra.mxu0 0.0
    %1084 = vmatprep.subr.mxu0 0.0
    %1085 = vmatpush1.msra.mxu0 0.0
    %1086 = vmatprep.subr.mxu0 0.0
    %1087 = vmatpush1.msra.mxu0 0.0
    %1088 = vmatprep.subr.mxu0 0.0
    %1089 = vmatpush1.msra.mxu0 0.0
    %1090 = vmatprep.subr.mxu0 0.0
    %1091 = vmatpush1.msra.mxu0 0.0
    %1092 = vmatprep.subr.mxu0 0.0
    %1093 = vmatpush1.msra.mxu0 0.0
    %1094 = vmatprep.subr.mxu0 0.0
    %1095 = vmatpush1.msra.mxu0 0.0
    %1096 = vmatprep.subr.mxu0 %v320
    %1097 = vmatpush1.msra.mxu0 %v319
    %1098 = vmatprep.subr.mxu0 %v318
    %1099 = vmatpush1.msra.mxu0 %v317
    %1100 = vmatprep.subr.mxu0 %v316
    %1101 = vmatpush1.msra.mxu0 %v315
    %1102 = vmatprep.subr.mxu0 %v314
    %1103 = vmatpush1.msra.mxu0 %v313
    %1104 = vmatprep.subr.mxu0 %v312
    %1105 = vmatpush1.msra.mxu0 %v311
    %1106 = vmatprep.subr.mxu0 %v310
    %1107 = vmatpush1.msra.mxu0 %v309
    %1108 = vmatprep.subr.mxu0 %v308
    %1109 = vmatpush1.msra.mxu0 %v307
    %1110 = vmatprep.subr.mxu0 %v306
    %1111 = vmatpush1.msra.mxu0 %v305
    %1112 = vmatprep.subr.mxu0 0.0
    %1113 = vmatpush2.msra.mxu0 0.0
    %1114 = vmatprep.subr.mxu0 0.0
    %1115 = vmatpush2.msra.mxu0 0.0
    %1116 = vmatprep.subr.mxu0 0.0
    %1117 = vmatpush2.msra.mxu0 0.0
    %1118 = vmatprep.subr.mxu0 0.0
    %1119 = vmatpush2.msra.mxu0 0.0
    %1120 = vmatprep.subr.mxu0 0.0
    %1121 = vmatpush2.msra.mxu0 0.0
    %1122 = vmatprep.subr.mxu0 0.0
    %1123 = vmatpush2.msra.mxu0 0.0
    %1124 = vmatprep.subr.mxu0 0.0
    %1125 = vmatpush2.msra.mxu0 0.0
    %1126 = vmatprep.subr.mxu0 0.0
    %1127 = vmatpush2.msra.mxu0 0.0
    %1128 = vmatprep.subr.mxu0 0.0
    %1129 = vmatpush2.msra.mxu0 0.0
    %1130 = vmatprep.subr.mxu0 0.0
    %1131 = vmatpush2.msra.mxu0 0.0
    %1132 = vmatprep.subr.mxu0 0.0
    %1133 = vmatpush2.msra.mxu0 0.0
    %1134 = vmatprep.subr.mxu0 0.0
    %1135 = vmatpush2.msra.mxu0 0.0
    %1136 = vmatprep.subr.mxu0 0.0
    %1137 = vmatpush2.msra.mxu0 0.0
    %1138 = vmatprep.subr.mxu0 0.0
    %1139 = vmatpush2.msra.mxu0 0.0
    %1140 = vmatprep.subr.mxu0 0.0
    %1141 = vmatpush2.msra.mxu0 0.0
    %1142 = vmatprep.subr.mxu0 0.0
    %1143 = vmatpush2.msra.mxu0 0.0
    %1144 = vmatprep.mubr.f32.mxu0 0.0
    %1145 = vmatmul.mubr.f32.gmra.mxu0 %v1078
    %v1146 = vpop.f32.mrf.mxu0
    %v1147 = vadd.f32 0.0, %v1146
    %v1148 = vpop.f32.mrf.mxu0
    %v1149 = vadd.f32 0.0, %v1148
    %1150 = vdwg.mxu0
    %v1151 = vadd.f32 %v253, %v1147
    %v1152 = vadd.f32 %v255, %v1149
    %v1153 = vxor.u32 %v1151, 2147483648
    %v1154 = vxor.u32 %v1152, 2147483648
    %v1155 = vmul.f32 %v1153, 1.442695
    %v1156 = vpow.pop %v1155
    %v1157 = vmul.f32 %v1154, 1.442695
    %v1158 = vpow.pop %v1157
    %v1159 = vadd.f32 %v1156, 1.0
    %v1160 = vadd.f32 %v1158, 1.0
    %v1161 = vrcp.pop %v1159
    %v1162 = vmul.f32 1.0, %v1161
    %v1163 = vrcp.pop %v1160
    %v1164 = vmul.f32 1.0, %v1163
    %v1165 = vtanh.pop %v1152
    %v1166 = vmul.f32 %v1162, %v1069
    %1168 = vrot.lane.b32.xlu0 %v1165, 64
    %v1169 = vpop.permute.xlu0 %1168
    %v1171 = vmul.f32 %v1162, %v1169
    %1173 = vrot.lane.b32.xlu0 %v1171, 64
    %v1174 = vpop.permute.xlu0 %1173
    %v1176 = vadd.f32 %v1166, %v1174
    %v1177 = vtanh.pop %v1176
    %1179 = vrot.lane.b32.xlu0 %v1177, 64
    %v1180 = vpop.permute.xlu0 %1179
    %v1182 = vmul.f32 %v1164, %v1180
    %v1183 = vadd.f32 %v1076, %v1182
    %v1185 = vsel %vm323, %v1182, 0
    %1187 = vmatprep.subr.mxu0 0.0
    %1188 = vmatpush1.msra.mxu0 0.0
    %1189 = vmatprep.subr.mxu0 0.0
    %1190 = vmatpush1.msra.mxu0 0.0
    %1191 = vmatprep.subr.mxu0 0.0
    %1192 = vmatpush1.msra.mxu0 0.0
    %1193 = vmatprep.subr.mxu0 0.0
    %1194 = vmatpush1.msra.mxu0 0.0
    %1195 = vmatprep.subr.mxu0 0.0
    %1196 = vmatpush1.msra.mxu0 0.0
    %1197 = vmatprep.subr.mxu0 0.0
    %1198 = vmatpush1.msra.mxu0 0.0
    %1199 = vmatprep.subr.mxu0 0.0
    %1200 = vmatpush1.msra.mxu0 0.0
    %1201 = vmatprep.subr.mxu0 0.0
    %1202 = vmatpush1.msra.mxu0 0.0
    %1203 = vmatprep.subr.mxu0 %v320
    %1204 = vmatpush1.msra.mxu0 %v319
    %1205 = vmatprep.subr.mxu0 %v318
    %1206 = vmatpush1.msra.mxu0 %v317
    %1207 = vmatprep.subr.mxu0 %v316
    %1208 = vmatpush1.msra.mxu0 %v315
    %1209 = vmatprep.subr.mxu0 %v314
    %1210 = vmatpush1.msra.mxu0 %v313
    %1211 = vmatprep.subr.mxu0 %v312
    %1212 = vmatpush1.msra.mxu0 %v311
    %1213 = vmatprep.subr.mxu0 %v310
    %1214 = vmatpush1.msra.mxu0 %v309
    %1215 = vmatprep.subr.mxu0 %v308
    %1216 = vmatpush1.msra.mxu0 %v307
    %1217 = vmatprep.subr.mxu0 %v306
    %1218 = vmatpush1.msra.mxu0 %v305
    %1219 = vmatprep.subr.mxu0 0.0
    %1220 = vmatpush2.msra.mxu0 0.0
    %1221 = vmatprep.subr.mxu0 0.0
    %1222 = vmatpush2.msra.mxu0 0.0
    %1223 = vmatprep.subr.mxu0 0.0
    %1224 = vmatpush2.msra.mxu0 0.0
    %1225 = vmatprep.subr.mxu0 0.0
    %1226 = vmatpush2.msra.mxu0 0.0
    %1227 = vmatprep.subr.mxu0 0.0
    %1228 = vmatpush2.msra.mxu0 0.0
    %1229 = vmatprep.subr.mxu0 0.0
    %1230 = vmatpush2.msra.mxu0 0.0
    %1231 = vmatprep.subr.mxu0 0.0
    %1232 = vmatpush2.msra.mxu0 0.0
    %1233 = vmatprep.subr.mxu0 0.0
    %1234 = vmatpush2.msra.mxu0 0.0
    %1235 = vmatprep.subr.mxu0 0.0
    %1236 = vmatpush2.msra.mxu0 0.0
    %1237 = vmatprep.subr.mxu0 0.0
    %1238 = vmatpush2.msra.mxu0 0.0
    %1239 = vmatprep.subr.mxu0 0.0
    %1240 = vmatpush2.msra.mxu0 0.0
    %1241 = vmatprep.subr.mxu0 0.0
    %1242 = vmatpush2.msra.mxu0 0.0
    %1243 = vmatprep.subr.mxu0 0.0
    %1244 = vmatpush2.msra.mxu0 0.0
    %1245 = vmatprep.subr.mxu0 0.0
    %1246 = vmatpush2.msra.mxu0 0.0
    %1247 = vmatprep.subr.mxu0 0.0
    %1248 = vmatpush2.msra.mxu0 0.0
    %1249 = vmatprep.subr.mxu0 0.0
    %1250 = vmatpush2.msra.mxu0 0.0
    %1251 = vmatprep.mubr.f32.mxu0 0.0
    %1252 = vmatmul.mubr.f32.gmra.mxu0 %v1185
    %v1253 = vpop.f32.mrf.mxu0
    %v1254 = vadd.f32 0.0, %v1253
    %v1255 = vpop.f32.mrf.mxu0
    %v1256 = vadd.f32 0.0, %v1255
    %1257 = vdwg.mxu0
    %v1258 = vadd.f32 %v259, %v1254
    %v1259 = vadd.f32 %v261, %v1256
    %v1260 = vxor.u32 %v1258, 2147483648
    %v1261 = vxor.u32 %v1259, 2147483648
    %v1262 = vmul.f32 %v1260, 1.442695
    %v1263 = vpow.pop %v1262
    %v1264 = vmul.f32 %v1261, 1.442695
    %v1265 = vpow.pop %v1264
    %v1266 = vadd.f32 %v1263, 1.0
    %v1267 = vadd.f32 %v1265, 1.0
    %v1268 = vrcp.pop %v1266
    %v1269 = vmul.f32 1.0, %v1268
    %v1270 = vrcp.pop %v1267
    %v1271 = vmul.f32 1.0, %v1270
    %v1272 = vtanh.pop %v1259
    %v1273 = vmul.f32 %v1269, %v1176
    %1275 = vrot.lane.b32.xlu0 %v1272, 64
    %v1276 = vpop.permute.xlu0 %1275
    %v1278 = vmul.f32 %v1269, %v1276
    %1280 = vrot.lane.b32.xlu0 %v1278, 64
    %v1281 = vpop.permute.xlu0 %1280
    %v1283 = vadd.f32 %v1273, %v1281
    %v1284 = vtanh.pop %v1283
    %1286 = vrot.lane.b32.xlu0 %v1284, 64
    %v1287 = vpop.permute.xlu0 %1286
    %v1289 = vmul.f32 %v1271, %v1287
    %v1290 = vadd.f32 %v1183, %v1289
    %v1292 = vsel %vm323, %v1289, 0
    %1294 = vmatprep.subr.mxu0 0.0
    %1295 = vmatpush1.msra.mxu0 0.0
    %1296 = vmatprep.subr.mxu0 0.0
    %1297 = vmatpush1.msra.mxu0 0.0
    %1298 = vmatprep.subr.mxu0 0.0
    %1299 = vmatpush1.msra.mxu0 0.0
    %1300 = vmatprep.subr.mxu0 0.0
    %1301 = vmatpush1.msra.mxu0 0.0
    %1302 = vmatprep.subr.mxu0 0.0
    %1303 = vmatpush1.msra.mxu0 0.0
    %1304 = vmatprep.subr.mxu0 0.0
    %1305 = vmatpush1.msra.mxu0 0.0
    %1306 = vmatprep.subr.mxu0 0.0
    %1307 = vmatpush1.msra.mxu0 0.0
    %1308 = vmatprep.subr.mxu0 0.0
    %1309 = vmatpush1.msra.mxu0 0.0
    %1310 = vmatprep.subr.mxu0 %v320
    %1311 = vmatpush1.msra.mxu0 %v319
    %1312 = vmatprep.subr.mxu0 %v318
    %1313 = vmatpush1.msra.mxu0 %v317
    %1314 = vmatprep.subr.mxu0 %v316
    %1315 = vmatpush1.msra.mxu0 %v315
    %1316 = vmatprep.subr.mxu0 %v314
    %1317 = vmatpush1.msra.mxu0 %v313
    %1318 = vmatprep.subr.mxu0 %v312
    %1319 = vmatpush1.msra.mxu0 %v311
    %1320 = vmatprep.subr.mxu0 %v310
    %1321 = vmatpush1.msra.mxu0 %v309
    %1322 = vmatprep.subr.mxu0 %v308
    %1323 = vmatpush1.msra.mxu0 %v307
    %1324 = vmatprep.subr.mxu0 %v306
    %1325 = vmatpush1.msra.mxu0 %v305
    %1326 = vmatprep.subr.mxu0 0.0
    %1327 = vmatpush2.msra.mxu0 0.0
    %1328 = vmatprep.subr.mxu0 0.0
    %1329 = vmatpush2.msra.mxu0 0.0
    %1330 = vmatprep.subr.mxu0 0.0
    %1331 = vmatpush2.msra.mxu0 0.0
    %1332 = vmatprep.subr.mxu0 0.0
    %1333 = vmatpush2.msra.mxu0 0.0
    %1334 = vmatprep.subr.mxu0 0.0
    %1335 = vmatpush2.msra.mxu0 0.0
    %1336 = vmatprep.subr.mxu0 0.0
    %1337 = vmatpush2.msra.mxu0 0.0
    %1338 = vmatprep.subr.mxu0 0.0
    %1339 = vmatpush2.msra.mxu0 0.0
    %1340 = vmatprep.subr.mxu0 0.0
    %1341 = vmatpush2.msra.mxu0 0.0
    %1342 = vmatprep.subr.mxu0 0.0
    %1343 = vmatpush2.msra.mxu0 0.0
    %1344 = vmatprep.subr.mxu0 0.0
    %1345 = vmatpush2.msra.mxu0 0.0
    %1346 = vmatprep.subr.mxu0 0.0
    %1347 = vmatpush2.msra.mxu0 0.0
    %1348 = vmatprep.subr.mxu0 0.0
    %1349 = vmatpush2.msra.mxu0 0.0
    %1350 = vmatprep.subr.mxu0 0.0
    %1351 = vmatpush2.msra.mxu0 0.0
    %1352 = vmatprep.subr.mxu0 0.0
    %1353 = vmatpush2.msra.mxu0 0.0
    %1354 = vmatprep.subr.mxu0 0.0
    %1355 = vmatpush2.msra.mxu0 0.0
    %1356 = vmatprep.subr.mxu0 0.0
    %1357 = vmatpush2.msra.mxu0 0.0
    %1358 = vmatprep.mubr.f32.mxu0 0.0
    %1359 = vmatmul.mubr.f32.gmra.mxu0 %v1292
    %v1360 = vpop.f32.mrf.mxu0
    %v1361 = vadd.f32 0.0, %v1360
    %v1362 = vpop.f32.mrf.mxu0
    %v1363 = vadd.f32 0.0, %v1362
    %1364 = vdwg.mxu0
    %v1365 = vadd.f32 %v265, %v1361
    %v1366 = vadd.f32 %v267, %v1363
    %v1367 = vxor.u32 %v1365, 2147483648
    %v1368 = vxor.u32 %v1366, 2147483648
    %v1369 = vmul.f32 %v1367, 1.442695
    %v1370 = vpow.pop %v1369
    %v1371 = vmul.f32 %v1368, 1.442695
    %v1372 = vpow.pop %v1371
    %v1373 = vadd.f32 %v1370, 1.0
    %v1374 = vadd.f32 %v1372, 1.0
    %v1375 = vrcp.pop %v1373
    %v1376 = vmul.f32 1.0, %v1375
    %v1377 = vrcp.pop %v1374
    %v1378 = vmul.f32 1.0, %v1377
    %v1379 = vtanh.pop %v1366
    %v1380 = vmul.f32 %v1376, %v1283
    %1382 = vrot.lane.b32.xlu0 %v1379, 64
    %v1383 = vpop.permute.xlu0 %1382
    %v1385 = vmul.f32 %v1376, %v1383
    %1387 = vrot.lane.b32.xlu0 %v1385, 64
    %v1388 = vpop.permute.xlu0 %1387
    %v1390 = vadd.f32 %v1380, %v1388
    %v1391 = vtanh.pop %v1390
    %1393 = vrot.lane.b32.xlu0 %v1391, 64
    %v1394 = vpop.permute.xlu0 %1393
    %v1396 = vmul.f32 %v1378, %v1394
    %v1397 = vadd.f32 %v1290, %v1396
    %v1399 = vsel %vm323, %v1396, 0
    %1401 = vmatprep.subr.mxu0 0.0
    %1402 = vmatpush1.msra.mxu0 0.0
    %1403 = vmatprep.subr.mxu0 0.0
    %1404 = vmatpush1.msra.mxu0 0.0
    %1405 = vmatprep.subr.mxu0 0.0
    %1406 = vmatpush1.msra.mxu0 0.0
    %1407 = vmatprep.subr.mxu0 0.0
    %1408 = vmatpush1.msra.mxu0 0.0
    %1409 = vmatprep.subr.mxu0 0.0
    %1410 = vmatpush1.msra.mxu0 0.0
    %1411 = vmatprep.subr.mxu0 0.0
    %1412 = vmatpush1.msra.mxu0 0.0
    %1413 = vmatprep.subr.mxu0 0.0
    %1414 = vmatpush1.msra.mxu0 0.0
    %1415 = vmatprep.subr.mxu0 0.0
    %1416 = vmatpush1.msra.mxu0 0.0
    %1417 = vmatprep.subr.mxu0 %v320
    %1418 = vmatpush1.msra.mxu0 %v319
    %1419 = vmatprep.subr.mxu0 %v318
    %1420 = vmatpush1.msra.mxu0 %v317
    %1421 = vmatprep.subr.mxu0 %v316
    %1422 = vmatpush1.msra.mxu0 %v315
    %1423 = vmatprep.subr.mxu0 %v314
    %1424 = vmatpush1.msra.mxu0 %v313
    %1425 = vmatprep.subr.mxu0 %v312
    %1426 = vmatpush1.msra.mxu0 %v311
    %1427 = vmatprep.subr.mxu0 %v310
    %1428 = vmatpush1.msra.mxu0 %v309
    %1429 = vmatprep.subr.mxu0 %v308
    %1430 = vmatpush1.msra.mxu0 %v307
    %1431 = vmatprep.subr.mxu0 %v306
    %1432 = vmatpush1.msra.mxu0 %v305
    %1433 = vmatprep.subr.mxu0 0.0
    %1434 = vmatpush2.msra.mxu0 0.0
    %1435 = vmatprep.subr.mxu0 0.0
    %1436 = vmatpush2.msra.mxu0 0.0
    %1437 = vmatprep.subr.mxu0 0.0
    %1438 = vmatpush2.msra.mxu0 0.0
    %1439 = vmatprep.subr.mxu0 0.0
    %1440 = vmatpush2.msra.mxu0 0.0
    %1441 = vmatprep.subr.mxu0 0.0
    %1442 = vmatpush2.msra.mxu0 0.0
    %1443 = vmatprep.subr.mxu0 0.0
    %1444 = vmatpush2.msra.mxu0 0.0
    %1445 = vmatprep.subr.mxu0 0.0
    %1446 = vmatpush2.msra.mxu0 0.0
    %1447 = vmatprep.subr.mxu0 0.0
    %1448 = vmatpush2.msra.mxu0 0.0
    %1449 = vmatprep.subr.mxu0 0.0
    %1450 = vmatpush2.msra.mxu0 0.0
    %1451 = vmatprep.subr.mxu0 0.0
    %1452 = vmatpush2.msra.mxu0 0.0
    %1453 = vmatprep.subr.mxu0 0.0
    %1454 = vmatpush2.msra.mxu0 0.0
    %1455 = vmatprep.subr.mxu0 0.0
    %1456 = vmatpush2.msra.mxu0 0.0
    %1457 = vmatprep.subr.mxu0 0.0
    %1458 = vmatpush2.msra.mxu0 0.0
    %1459 = vmatprep.subr.mxu0 0.0
    %1460 = vmatpush2.msra.mxu0 0.0
    %1461 = vmatprep.subr.mxu0 0.0
    %1462 = vmatpush2.msra.mxu0 0.0
    %1463 = vmatprep.subr.mxu0 0.0
    %1464 = vmatpush2.msra.mxu0 0.0
    %1465 = vmatprep.mubr.f32.mxu0 0.0
    %1466 = vmatmul.mubr.f32.gmra.mxu0 %v1399
    %v1467 = vpop.f32.mrf.mxu0
    %v1468 = vadd.f32 0.0, %v1467
    %v1469 = vpop.f32.mrf.mxu0
    %v1470 = vadd.f32 0.0, %v1469
    %1471 = vdwg.mxu0
    %v1472 = vadd.f32 %v271, %v1468
    %v1473 = vadd.f32 %v273, %v1470
    %v1474 = vxor.u32 %v1472, 2147483648
    %v1475 = vxor.u32 %v1473, 2147483648
    %v1476 = vmul.f32 %v1474, 1.442695
    %v1477 = vpow.pop %v1476
    %v1478 = vmul.f32 %v1475, 1.442695
    %v1479 = vpow.pop %v1478
    %v1480 = vadd.f32 %v1477, 1.0
    %v1481 = vadd.f32 %v1479, 1.0
    %v1482 = vrcp.pop %v1480
    %v1483 = vmul.f32 1.0, %v1482
    %v1484 = vrcp.pop %v1481
    %v1485 = vmul.f32 1.0, %v1484
    %v1486 = vtanh.pop %v1473
    %v1487 = vmul.f32 %v1483, %v1390
    %1489 = vrot.lane.b32.xlu0 %v1486, 64
    %v1490 = vpop.permute.xlu0 %1489
    %v1492 = vmul.f32 %v1483, %v1490
    %1494 = vrot.lane.b32.xlu0 %v1492, 64
    %v1495 = vpop.permute.xlu0 %1494
    %v1497 = vadd.f32 %v1487, %v1495
    %v1498 = vtanh.pop %v1497
    %1500 = vrot.lane.b32.xlu0 %v1498, 64
    %v1501 = vpop.permute.xlu0 %1500
    %v1503 = vmul.f32 %v1485, %v1501
    %v1504 = vadd.f32 %v1397, %v1503
    %v1506 = vsel %vm323, %v1503, 0
    %1508 = vmatprep.subr.mxu0 0.0
    %1509 = vmatpush1.msra.mxu0 0.0
    %1510 = vmatprep.subr.mxu0 0.0
    %1511 = vmatpush1.msra.mxu0 0.0
    %1512 = vmatprep.subr.mxu0 0.0
    %1513 = vmatpush1.msra.mxu0 0.0
    %1514 = vmatprep.subr.mxu0 0.0
    %1515 = vmatpush1.msra.mxu0 0.0
    %1516 = vmatprep.subr.mxu0 0.0
    %1517 = vmatpush1.msra.mxu0 0.0
    %1518 = vmatprep.subr.mxu0 0.0
    %1519 = vmatpush1.msra.mxu0 0.0
    %1520 = vmatprep.subr.mxu0 0.0
    %1521 = vmatpush1.msra.mxu0 0.0
    %1522 = vmatprep.subr.mxu0 0.0
    %1523 = vmatpush1.msra.mxu0 0.0
    %1524 = vmatprep.subr.mxu0 %v320
    %1525 = vmatpush1.msra.mxu0 %v319
    %1526 = vmatprep.subr.mxu0 %v318
    %1527 = vmatpush1.msra.mxu0 %v317
    %1528 = vmatprep.subr.mxu0 %v316
    %1529 = vmatpush1.msra.mxu0 %v315
    %1530 = vmatprep.subr.mxu0 %v314
    %1531 = vmatpush1.msra.mxu0 %v313
    %1532 = vmatprep.subr.mxu0 %v312
    %1533 = vmatpush1.msra.mxu0 %v311
    %1534 = vmatprep.subr.mxu0 %v310
    %1535 = vmatpush1.msra.mxu0 %v309
    %1536 = vmatprep.subr.mxu0 %v308
    %1537 = vmatpush1.msra.mxu0 %v307
    %1538 = vmatprep.subr.mxu0 %v306
    %1539 = vmatpush1.msra.mxu0 %v305
    %1540 = vmatprep.subr.mxu0 0.0
    %1541 = vmatpush2.msra.mxu0 0.0
    %1542 = vmatprep.subr.mxu0 0.0
    %1543 = vmatpush2.msra.mxu0 0.0
    %1544 = vmatprep.subr.mxu0 0.0
    %1545 = vmatpush2.msra.mxu0 0.0
    %1546 = vmatprep.subr.mxu0 0.0
    %1547 = vmatpush2.msra.mxu0 0.0
    %1548 = vmatprep.subr.mxu0 0.0
    %1549 = vmatpush2.msra.mxu0 0.0
    %1550 = vmatprep.subr.mxu0 0.0
    %1551 = vmatpush2.msra.mxu0 0.0
    %1552 = vmatprep.subr.mxu0 0.0
    %1553 = vmatpush2.msra.mxu0 0.0
    %1554 = vmatprep.subr.mxu0 0.0
    %1555 = vmatpush2.msra.mxu0 0.0
    %1556 = vmatprep.subr.mxu0 0.0
    %1557 = vmatpush2.msra.mxu0 0.0
    %1558 = vmatprep.subr.mxu0 0.0
    %1559 = vmatpush2.msra.mxu0 0.0
    %1560 = vmatprep.subr.mxu0 0.0
    %1561 = vmatpush2.msra.mxu0 0.0
    %1562 = vmatprep.subr.mxu0 0.0
    %1563 = vmatpush2.msra.mxu0 0.0
    %1564 = vmatprep.subr.mxu0 0.0
    %1565 = vmatpush2.msra.mxu0 0.0
    %1566 = vmatprep.subr.mxu0 0.0
    %1567 = vmatpush2.msra.mxu0 0.0
    %1568 = vmatprep.subr.mxu0 0.0
    %1569 = vmatpush2.msra.mxu0 0.0
    %1570 = vmatprep.subr.mxu0 0.0
    %1571 = vmatpush2.msra.mxu0 0.0
    %1572 = vmatprep.mubr.f32.mxu0 0.0
    %1573 = vmatmul.mubr.f32.gmra.mxu0 %v1506
    %v1574 = vpop.f32.mrf.mxu0
    %v1575 = vadd.f32 0.0, %v1574
    %v1576 = vpop.f32.mrf.mxu0
    %v1577 = vadd.f32 0.0, %v1576
    %1578 = vdwg.mxu0
    %v1579 = vadd.f32 %v277, %v1575
    %v1580 = vadd.f32 %v279, %v1577
    %v1581 = vxor.u32 %v1579, 2147483648
    %v1582 = vxor.u32 %v1580, 2147483648
    %v1583 = vmul.f32 %v1581, 1.442695
    %v1584 = vpow.pop %v1583
    %v1585 = vmul.f32 %v1582, 1.442695
    %v1586 = vpow.pop %v1585
    %v1587 = vadd.f32 %v1584, 1.0
    %v1588 = vadd.f32 %v1586, 1.0
    %v1589 = vrcp.pop %v1587
    %v1590 = vmul.f32 1.0, %v1589
    %v1591 = vrcp.pop %v1588
    %v1592 = vmul.f32 1.0, %v1591
    %v1593 = vtanh.pop %v1580
    %v1594 = vmul.f32 %v1590, %v1497
    %1596 = vrot.lane.b32.xlu0 %v1593, 64
    %v1597 = vpop.permute.xlu0 %1596
    %v1599 = vmul.f32 %v1590, %v1597
    %1601 = vrot.lane.b32.xlu0 %v1599, 64
    %v1602 = vpop.permute.xlu0 %1601
    %v1604 = vadd.f32 %v1594, %v1602
    %v1605 = vtanh.pop %v1604
    %1607 = vrot.lane.b32.xlu0 %v1605, 64
    %v1608 = vpop.permute.xlu0 %1607
    %v1610 = vmul.f32 %v1592, %v1608
    %v1611 = vadd.f32 %v1504, %v1610
    %v1613 = vsel %vm323, %v1610, 0
    %1615 = vmatprep.subr.mxu0 0.0
    %1616 = vmatpush1.msra.mxu0 0.0
    %1617 = vmatprep.subr.mxu0 0.0
    %1618 = vmatpush1.msra.mxu0 0.0
    %1619 = vmatprep.subr.mxu0 0.0
    %1620 = vmatpush1.msra.mxu0 0.0
    %1621 = vmatprep.subr.mxu0 0.0
    %1622 = vmatpush1.msra.mxu0 0.0
    %1623 = vmatprep.subr.mxu0 0.0
    %1624 = vmatpush1.msra.mxu0 0.0
    %1625 = vmatprep.subr.mxu0 0.0
    %1626 = vmatpush1.msra.mxu0 0.0
    %1627 = vmatprep.subr.mxu0 0.0
    %1628 = vmatpush1.msra.mxu0 0.0
    %1629 = vmatprep.subr.mxu0 0.0
    %1630 = vmatpush1.msra.mxu0 0.0
    %1631 = vmatprep.subr.mxu0 %v320
    %1632 = vmatpush1.msra.mxu0 %v319
    %1633 = vmatprep.subr.mxu0 %v318
    %1634 = vmatpush1.msra.mxu0 %v317
    %1635 = vmatprep.subr.mxu0 %v316
    %1636 = vmatpush1.msra.mxu0 %v315
    %1637 = vmatprep.subr.mxu0 %v314
    %1638 = vmatpush1.msra.mxu0 %v313
    %1639 = vmatprep.subr.mxu0 %v312
    %1640 = vmatpush1.msra.mxu0 %v311
    %1641 = vmatprep.subr.mxu0 %v310
    %1642 = vmatpush1.msra.mxu0 %v309
    %1643 = vmatprep.subr.mxu0 %v308
    %1644 = vmatpush1.msra.mxu0 %v307
    %1645 = vmatprep.subr.mxu0 %v306
    %1646 = vmatpush1.msra.mxu0 %v305
    %1647 = vmatprep.subr.mxu0 0.0
    %1648 = vmatpush2.msra.mxu0 0.0
    %1649 = vmatprep.subr.mxu0 0.0
    %1650 = vmatpush2.msra.mxu0 0.0
    %1651 = vmatprep.subr.mxu0 0.0
    %1652 = vmatpush2.msra.mxu0 0.0
    %1653 = vmatprep.subr.mxu0 0.0
    %1654 = vmatpush2.msra.mxu0 0.0
    %1655 = vmatprep.subr.mxu0 0.0
    %1656 = vmatpush2.msra.mxu0 0.0
    %1657 = vmatprep.subr.mxu0 0.0
    %1658 = vmatpush2.msra.mxu0 0.0
    %1659 = vmatprep.subr.mxu0 0.0
    %1660 = vmatpush2.msra.mxu0 0.0
    %1661 = vmatprep.subr.mxu0 0.0
    %1662 = vmatpush2.msra.mxu0 0.0
    %1663 = vmatprep.subr.mxu0 0.0
    %1664 = vmatpush2.msra.mxu0 0.0
    %1665 = vmatprep.subr.mxu0 0.0
    %1666 = vmatpush2.msra.mxu0 0.0
    %1667 = vmatprep.subr.mxu0 0.0
    %1668 = vmatpush2.msra.mxu0 0.0
    %1669 = vmatprep.subr.mxu0 0.0
    %1670 = vmatpush2.msra.mxu0 0.0
    %1671 = vmatprep.subr.mxu0 0.0
    %1672 = vmatpush2.msra.mxu0 0.0
    %1673 = vmatprep.subr.mxu0 0.0
    %1674 = vmatpush2.msra.mxu0 0.0
    %1675 = vmatprep.subr.mxu0 0.0
    %1676 = vmatpush2.msra.mxu0 0.0
    %1677 = vmatprep.subr.mxu0 0.0
    %1678 = vmatpush2.msra.mxu0 0.0
    %1679 = vmatprep.mubr.f32.mxu0 0.0
    %1680 = vmatmul.mubr.f32.gmra.mxu0 %v1613
    %v1681 = vpop.f32.mrf.mxu0
    %v1682 = vadd.f32 0.0, %v1681
    %v1683 = vpop.f32.mrf.mxu0
    %v1684 = vadd.f32 0.0, %v1683
    %1685 = vdwg.mxu0
    %v1686 = vadd.f32 %v283, %v1682
    %v1687 = vadd.f32 %v285, %v1684
    %v1688 = vxor.u32 %v1686, 2147483648
    %v1689 = vxor.u32 %v1687, 2147483648
    %v1690 = vmul.f32 %v1688, 1.442695
    %v1691 = vpow.pop %v1690
    %v1692 = vmul.f32 %v1689, 1.442695
    %v1693 = vpow.pop %v1692
    %v1694 = vadd.f32 %v1691, 1.0
    %v1695 = vadd.f32 %v1693, 1.0
    %v1696 = vrcp.pop %v1694
    %v1697 = vmul.f32 1.0, %v1696
    %v1698 = vrcp.pop %v1695
    %v1699 = vmul.f32 1.0, %v1698
    %v1700 = vtanh.pop %v1687
    %v1701 = vmul.f32 %v1697, %v1604
    %1703 = vrot.lane.b32.xlu0 %v1700, 64
    %v1704 = vpop.permute.xlu0 %1703
    %v1706 = vmul.f32 %v1697, %v1704
    %1708 = vrot.lane.b32.xlu0 %v1706, 64
    %v1709 = vpop.permute.xlu0 %1708
    %v1711 = vadd.f32 %v1701, %v1709
    %v1712 = vtanh.pop %v1711
    %1714 = vrot.lane.b32.xlu0 %v1712, 64
    %v1715 = vpop.permute.xlu0 %1714
    %v1717 = vmul.f32 %v1699, %v1715
    %v1718 = vadd.f32 %v1611, %v1717
    %v1720 = vsel %vm323, %v1717, 0
    %1722 = vmatprep.subr.mxu0 0.0
    %1723 = vmatpush1.msra.mxu0 0.0
    %1724 = vmatprep.subr.mxu0 0.0
    %1725 = vmatpush1.msra.mxu0 0.0
    %1726 = vmatprep.subr.mxu0 0.0
    %1727 = vmatpush1.msra.mxu0 0.0
    %1728 = vmatprep.subr.mxu0 0.0
    %1729 = vmatpush1.msra.mxu0 0.0
    %1730 = vmatprep.subr.mxu0 0.0
    %1731 = vmatpush1.msra.mxu0 0.0
    %1732 = vmatprep.subr.mxu0 0.0
    %1733 = vmatpush1.msra.mxu0 0.0
    %1734 = vmatprep.subr.mxu0 0.0
    %1735 = vmatpush1.msra.mxu0 0.0
    %1736 = vmatprep.subr.mxu0 0.0
    %1737 = vmatpush1.msra.mxu0 0.0
    %1738 = vmatprep.subr.mxu0 %v320
    %1739 = vmatpush1.msra.mxu0 %v319
    %1740 = vmatprep.subr.mxu0 %v318
    %1741 = vmatpush1.msra.mxu0 %v317
    %1742 = vmatprep.subr.mxu0 %v316
    %1743 = vmatpush1.msra.mxu0 %v315
    %1744 = vmatprep.subr.mxu0 %v314
    %1745 = vmatpush1.msra.mxu0 %v313
    %1746 = vmatprep.subr.mxu0 %v312
    %1747 = vmatpush1.msra.mxu0 %v311
    %1748 = vmatprep.subr.mxu0 %v310
    %1749 = vmatpush1.msra.mxu0 %v309
    %1750 = vmatprep.subr.mxu0 %v308
    %1751 = vmatpush1.msra.mxu0 %v307
    %1752 = vmatprep.subr.mxu0 %v306
    %1753 = vmatpush1.msra.mxu0 %v305
    %1754 = vmatprep.subr.mxu0 0.0
    %1755 = vmatpush2.msra.mxu0 0.0
    %1756 = vmatprep.subr.mxu0 0.0
    %1757 = vmatpush2.msra.mxu0 0.0
    %1758 = vmatprep.subr.mxu0 0.0
    %1759 = vmatpush2.msra.mxu0 0.0
    %1760 = vmatprep.subr.mxu0 0.0
    %1761 = vmatpush2.msra.mxu0 0.0
    %1762 = vmatprep.subr.mxu0 0.0
    %1763 = vmatpush2.msra.mxu0 0.0
    %1764 = vmatprep.subr.mxu0 0.0
    %1765 = vmatpush2.msra.mxu0 0.0
    %1766 = vmatprep.subr.mxu0 0.0
    %1767 = vmatpush2.msra.mxu0 0.0
    %1768 = vmatprep.subr.mxu0 0.0
    %1769 = vmatpush2.msra.mxu0 0.0
    %1770 = vmatprep.subr.mxu0 0.0
    %1771 = vmatpush2.msra.mxu0 0.0
    %1772 = vmatprep.subr.mxu0 0.0
    %1773 = vmatpush2.msra.mxu0 0.0
    %1774 = vmatprep.subr.mxu0 0.0
    %1775 = vmatpush2.msra.mxu0 0.0
    %1776 = vmatprep.subr.mxu0 0.0
    %1777 = vmatpush2.msra.mxu0 0.0
    %1778 = vmatprep.subr.mxu0 0.0
    %1779 = vmatpush2.msra.mxu0 0.0
    %1780 = vmatprep.subr.mxu0 0.0
    %1781 = vmatpush2.msra.mxu0 0.0
    %1782 = vmatprep.subr.mxu0 0.0
    %1783 = vmatpush2.msra.mxu0 0.0
    %1784 = vmatprep.subr.mxu0 0.0
    %1785 = vmatpush2.msra.mxu0 0.0
    %1786 = vmatprep.mubr.f32.mxu0 0.0
    %1787 = vmatmul.mubr.f32.gmra.mxu0 %v1720
    %v1788 = vpop.f32.mrf.mxu0
    %v1789 = vadd.f32 0.0, %v1788
    %v1790 = vpop.f32.mrf.mxu0
    %v1791 = vadd.f32 0.0, %v1790
    %1792 = vdwg.mxu0
    %v1793 = vadd.f32 %v289, %v1789
    %v1794 = vadd.f32 %v291, %v1791
    %v1795 = vxor.u32 %v1793, 2147483648
    %v1796 = vxor.u32 %v1794, 2147483648
    %v1797 = vmul.f32 %v1795, 1.442695
    %v1798 = vpow.pop %v1797
    %v1799 = vmul.f32 %v1796, 1.442695
    %v1800 = vpow.pop %v1799
    %v1801 = vadd.f32 %v1798, 1.0
    %v1802 = vadd.f32 %v1800, 1.0
    %v1803 = vrcp.pop %v1801
    %v1804 = vmul.f32 1.0, %v1803
    %v1805 = vrcp.pop %v1802
    %v1806 = vmul.f32 1.0, %v1805
    %v1807 = vtanh.pop %v1794
    %v1808 = vmul.f32 %v1804, %v1711
    %1810 = vrot.lane.b32.xlu0 %v1807, 64
    %v1811 = vpop.permute.xlu0 %1810
    %v1813 = vmul.f32 %v1804, %v1811
    %1815 = vrot.lane.b32.xlu0 %v1813, 64
    %v1816 = vpop.permute.xlu0 %1815
    %v1818 = vadd.f32 %v1808, %v1816
    %v1819 = vtanh.pop %v1818
    %1821 = vrot.lane.b32.xlu0 %v1819, 64
    %v1822 = vpop.permute.xlu0 %1821
    %v1824 = vmul.f32 %v1806, %v1822
    %v1825 = vadd.f32 %v1718, %v1824
    %v1827 = vsel %vm323, %v1824, 0
    %1829 = vmatprep.subr.mxu0 0.0
    %1830 = vmatpush1.msra.mxu0 0.0
    %1831 = vmatprep.subr.mxu0 0.0
    %1832 = vmatpush1.msra.mxu0 0.0
    %1833 = vmatprep.subr.mxu0 0.0
    %1834 = vmatpush1.msra.mxu0 0.0
    %1835 = vmatprep.subr.mxu0 0.0
    %1836 = vmatpush1.msra.mxu0 0.0
    %1837 = vmatprep.subr.mxu0 0.0
    %1838 = vmatpush1.msra.mxu0 0.0
    %1839 = vmatprep.subr.mxu0 0.0
    %1840 = vmatpush1.msra.mxu0 0.0
    %1841 = vmatprep.subr.mxu0 0.0
    %1842 = vmatpush1.msra.mxu0 0.0
    %1843 = vmatprep.subr.mxu0 0.0
    %1844 = vmatpush1.msra.mxu0 0.0
    %1845 = vmatprep.subr.mxu0 %v320
    %1846 = vmatpush1.msra.mxu0 %v319
    %1847 = vmatprep.subr.mxu0 %v318
    %1848 = vmatpush1.msra.mxu0 %v317
    %1849 = vmatprep.subr.mxu0 %v316
    %1850 = vmatpush1.msra.mxu0 %v315
    %1851 = vmatprep.subr.mxu0 %v314
    %1852 = vmatpush1.msra.mxu0 %v313
    %1853 = vmatprep.subr.mxu0 %v312
    %1854 = vmatpush1.msra.mxu0 %v311
    %1855 = vmatprep.subr.mxu0 %v310
    %1856 = vmatpush1.msra.mxu0 %v309
    %1857 = vmatprep.subr.mxu0 %v308
    %1858 = vmatpush1.msra.mxu0 %v307
    %1859 = vmatprep.subr.mxu0 %v306
    %1860 = vmatpush1.msra.mxu0 %v305
    %1861 = vmatprep.subr.mxu0 0.0
    %1862 = vmatpush2.msra.mxu0 0.0
    %1863 = vmatprep.subr.mxu0 0.0
    %1864 = vmatpush2.msra.mxu0 0.0
    %1865 = vmatprep.subr.mxu0 0.0
    %1866 = vmatpush2.msra.mxu0 0.0
    %1867 = vmatprep.subr.mxu0 0.0
    %1868 = vmatpush2.msra.mxu0 0.0
    %1869 = vmatprep.subr.mxu0 0.0
    %1870 = vmatpush2.msra.mxu0 0.0
    %1871 = vmatprep.subr.mxu0 0.0
    %1872 = vmatpush2.msra.mxu0 0.0
    %1873 = vmatprep.subr.mxu0 0.0
    %1874 = vmatpush2.msra.mxu0 0.0
    %1875 = vmatprep.subr.mxu0 0.0
    %1876 = vmatpush2.msra.mxu0 0.0
    %1877 = vmatprep.subr.mxu0 0.0
    %1878 = vmatpush2.msra.mxu0 0.0
    %1879 = vmatprep.subr.mxu0 0.0
    %1880 = vmatpush2.msra.mxu0 0.0
    %1881 = vmatprep.subr.mxu0 0.0
    %1882 = vmatpush2.msra.mxu0 0.0
    %1883 = vmatprep.subr.mxu0 0.0
    %1884 = vmatpush2.msra.mxu0 0.0
    %1885 = vmatprep.subr.mxu0 0.0
    %1886 = vmatpush2.msra.mxu0 0.0
    %1887 = vmatprep.subr.mxu0 0.0
    %1888 = vmatpush2.msra.mxu0 0.0
    %1889 = vmatprep.subr.mxu0 0.0
    %1890 = vmatpush2.msra.mxu0 0.0
    %1891 = vmatprep.subr.mxu0 0.0
    %1892 = vmatpush2.msra.mxu0 0.0
    %1893 = vmatprep.mubr.f32.mxu0 0.0
    %1894 = vmatmul.mubr.f32.gmra.mxu0 %v1827
    %v1895 = vpop.f32.mrf.mxu0
    %v1896 = vadd.f32 0.0, %v1895
    %v1897 = vpop.f32.mrf.mxu0
    %v1898 = vadd.f32 0.0, %v1897
    %1899 = vdwg.mxu0
    %v1900 = vadd.f32 %v295, %v1896
    %v1901 = vadd.f32 %v297, %v1898
    %v1902 = vxor.u32 %v1900, 2147483648
    %v1903 = vxor.u32 %v1901, 2147483648
    %v1904 = vmul.f32 %v1902, 1.442695
    %v1905 = vpow.pop %v1904
    %v1906 = vmul.f32 %v1903, 1.442695
    %v1907 = vpow.pop %v1906
    %v1908 = vadd.f32 %v1905, 1.0
    %v1909 = vadd.f32 %v1907, 1.0
    %v1910 = vrcp.pop %v1908
    %v1911 = vmul.f32 1.0, %v1910
    %v1912 = vrcp.pop %v1909
    %v1913 = vmul.f32 1.0, %v1912
    %v1914 = vtanh.pop %v1901
    %v1915 = vmul.f32 %v1911, %v1818
    %1917 = vrot.lane.b32.xlu0 %v1914, 64
    %v1918 = vpop.permute.xlu0 %1917
    %v1920 = vmul.f32 %v1911, %v1918
    %1922 = vrot.lane.b32.xlu0 %v1920, 64
    %v1923 = vpop.permute.xlu0 %1922
    %v1925 = vadd.f32 %v1915, %v1923
    %v1926 = vtanh.pop %v1925
    %1928 = vrot.lane.b32.xlu0 %v1926, 64
    %v1929 = vpop.permute.xlu0 %1928
    %v1931 = vmul.f32 %v1913, %v1929
    %v1932 = vadd.f32 %v1825, %v1931
    %v1934 = vsel %vm323, %v1931, 0
    %1936 = vmatprep.subr.mxu0 0.0
    %1937 = vmatpush1.msra.mxu0 0.0
    %1938 = vmatprep.subr.mxu0 0.0
    %1939 = vmatpush1.msra.mxu0 0.0
    %1940 = vmatprep.subr.mxu0 0.0
    %1941 = vmatpush1.msra.mxu0 0.0
    %1942 = vmatprep.subr.mxu0 0.0
    %1943 = vmatpush1.msra.mxu0 0.0
    %1944 = vmatprep.subr.mxu0 0.0
    %1945 = vmatpush1.msra.mxu0 0.0
    %1946 = vmatprep.subr.mxu0 0.0
    %1947 = vmatpush1.msra.mxu0 0.0
    %1948 = vmatprep.subr.mxu0 0.0
    %1949 = vmatpush1.msra.mxu0 0.0
    %1950 = vmatprep.subr.mxu0 0.0
    %1951 = vmatpush1.msra.mxu0 0.0
    %1952 = vmatprep.subr.mxu0 %v320
    %1953 = vmatpush1.msra.mxu0 %v319
    %1954 = vmatprep.subr.mxu0 %v318
    %1955 = vmatpush1.msra.mxu0 %v317
    %1956 = vmatprep.subr.mxu0 %v316
    %1957 = vmatpush1.msra.mxu0 %v315
    %1958 = vmatprep.subr.mxu0 %v314
    %1959 = vmatpush1.msra.mxu0 %v313
    %1960 = vmatprep.subr.mxu0 %v312
    %1961 = vmatpush1.msra.mxu0 %v311
    %1962 = vmatprep.subr.mxu0 %v310
    %1963 = vmatpush1.msra.mxu0 %v309
    %1964 = vmatprep.subr.mxu0 %v308
    %1965 = vmatpush1.msra.mxu0 %v307
    %1966 = vmatprep.subr.mxu0 %v306
    %1967 = vmatpush1.msra.mxu0 %v305
    %1968 = vmatprep.subr.mxu0 0.0
    %1969 = vmatpush2.msra.mxu0 0.0
    %1970 = vmatprep.subr.mxu0 0.0
    %1971 = vmatpush2.msra.mxu0 0.0
    %1972 = vmatprep.subr.mxu0 0.0
    %1973 = vmatpush2.msra.mxu0 0.0
    %1974 = vmatprep.subr.mxu0 0.0
    %1975 = vmatpush2.msra.mxu0 0.0
    %1976 = vmatprep.subr.mxu0 0.0
    %1977 = vmatpush2.msra.mxu0 0.0
    %1978 = vmatprep.subr.mxu0 0.0
    %1979 = vmatpush2.msra.mxu0 0.0
    %1980 = vmatprep.subr.mxu0 0.0
    %1981 = vmatpush2.msra.mxu0 0.0
    %1982 = vmatprep.subr.mxu0 0.0
    %1983 = vmatpush2.msra.mxu0 0.0
    %1984 = vmatprep.subr.mxu0 0.0
    %1985 = vmatpush2.msra.mxu0 0.0
    %1986 = vmatprep.subr.mxu0 0.0
    %1987 = vmatpush2.msra.mxu0 0.0
    %1988 = vmatprep.subr.mxu0 0.0
    %1989 = vmatpush2.msra.mxu0 0.0
    %1990 = vmatprep.subr.mxu0 0.0
    %1991 = vmatpush2.msra.mxu0 0.0
    %1992 = vmatprep.subr.mxu0 0.0
    %1993 = vmatpush2.msra.mxu0 0.0
    %1994 = vmatprep.subr.mxu0 0.0
    %1995 = vmatpush2.msra.mxu0 0.0
    %1996 = vmatprep.subr.mxu0 0.0
    %1997 = vmatpush2.msra.mxu0 0.0
    %1998 = vmatprep.subr.mxu0 0.0
    %1999 = vmatpush2.msra.mxu0 0.0
    %2000 = vmatprep.mubr.f32.mxu0 0.0
    %2001 = vmatmul.mubr.f32.gmra.mxu0 %v1934
    %v2002 = vpop.f32.mrf.mxu0
    %v2003 = vadd.f32 0.0, %v2002
    %v2004 = vpop.f32.mrf.mxu0
    %v2005 = vadd.f32 0.0, %v2004
    %2006 = vdwg.mxu0
    %v2007 = vadd.f32 %v301, %v2003
    %v2008 = vadd.f32 %v303, %v2005
    %v2009 = vxor.u32 %v2007, 2147483648
    %v2010 = vxor.u32 %v2008, 2147483648
    %v2011 = vmul.f32 %v2009, 1.442695
    %v2012 = vpow.pop %v2011
    %v2013 = vmul.f32 %v2010, 1.442695
    %v2014 = vpow.pop %v2013
    %v2015 = vadd.f32 %v2012, 1.0
    %v2016 = vadd.f32 %v2014, 1.0
    %v2017 = vrcp.pop %v2015
    %v2018 = vmul.f32 1.0, %v2017
    %v2019 = vrcp.pop %v2016
    %v2020 = vmul.f32 1.0, %v2019
    %v2021 = vtanh.pop %v2008
    %v2022 = vmul.f32 %v2018, %v1925
    %2024 = vrot.lane.b32.xlu0 %v2021, 64
    %v2025 = vpop.permute.xlu0 %2024
    %v2027 = vmul.f32 %v2018, %v2025
    %2029 = vrot.lane.b32.xlu0 %v2027, 64
    %v2030 = vpop.permute.xlu0 %2029
    %v2032 = vadd.f32 %v2022, %v2030
    %v2033 = vtanh.pop %v2032
    %2035 = vrot.lane.b32.xlu0 %v2033, 64
    %v2036 = vpop.permute.xlu0 %2035
    %v2038 = vmul.f32 %v2020, %v2036
    %v2039 = vadd.f32 %v1932, %v2038
    %v2040 = vld [vmem:[%s6] sm:$0xff]
    %v2041 = vld [vmem:[%s6 + $0x8] sm:$0xff]
    %v2042 = vld [vmem:[%s6 + $0x10] sm:$0xff]
    %v2043 = vld [vmem:[%s6 + $0x18] sm:$0xff]
    %v2044 = vld [vmem:[%s6 + $0x20] sm:$0xff]
    %v2045 = vld [vmem:[%s6 + $0x28] sm:$0xff]
    %v2046 = vld [vmem:[%s6 + $0x30] sm:$0xff]
    %v2047 = vld [vmem:[%s6 + $0x38] sm:$0xff]
    %v2048 = vld [vmem:[%s7] sm:$0x1]
    %v2050 = vlaneseq
    %v2051 = vshrl.u32 %v2050, 7
    %v2052 = vsub.s32 0, %v2051
    %v2053 = vrot.slane %v2048, %v2052
    %v2056 = vsel %vm323, %v2039, 0
    %2058 = vmatprep.subr.mxu0 0.0
    %2059 = vmatpush1.msra.mxu0 0.0
    %2060 = vmatprep.subr.mxu0 0.0
    %2061 = vmatpush1.msra.mxu0 0.0
    %2062 = vmatprep.subr.mxu0 0.0
    %2063 = vmatpush1.msra.mxu0 0.0
    %2064 = vmatprep.subr.mxu0 0.0
    %2065 = vmatpush1.msra.mxu0 0.0
    %2066 = vmatprep.subr.mxu0 0.0
    %2067 = vmatpush1.msra.mxu0 0.0
    %2068 = vmatprep.subr.mxu0 0.0
    %2069 = vmatpush1.msra.mxu0 0.0
    %2070 = vmatprep.subr.mxu0 0.0
    %2071 = vmatpush1.msra.mxu0 0.0
    %2072 = vmatprep.subr.mxu0 0.0
    %2073 = vmatpush1.msra.mxu0 0.0
    %2074 = vmatprep.subr.mxu0 0.0
    %2075 = vmatpush1.msra.mxu0 %v2047
    %2076 = vmatprep.subr.mxu0 0.0
    %2077 = vmatpush1.msra.mxu0 %v2046
    %2078 = vmatprep.subr.mxu0 0.0
    %2079 = vmatpush1.msra.mxu0 %v2045
    %2080 = vmatprep.subr.mxu0 0.0
    %2081 = vmatpush1.msra.mxu0 %v2044
    %2082 = vmatprep.subr.mxu0 0.0
    %2083 = vmatpush1.msra.mxu0 %v2043
    %2084 = vmatprep.subr.mxu0 0.0
    %2085 = vmatpush1.msra.mxu0 %v2042
    %2086 = vmatprep.subr.mxu0 0.0
    %2087 = vmatpush1.msra.mxu0 %v2041
    %2088 = vmatprep.subr.mxu0 0.0
    %2089 = vmatpush1.msra.mxu0 %v2040
    %2090 = vmatprep.subr.mxu0 0.0
    %2091 = vmatpush2.msra.mxu0 0.0
    %2092 = vmatprep.subr.mxu0 0.0
    %2093 = vmatpush2.msra.mxu0 0.0
    %2094 = vmatprep.subr.mxu0 0.0
    %2095 = vmatpush2.msra.mxu0 0.0
    %2096 = vmatprep.subr.mxu0 0.0
    %2097 = vmatpush2.msra.mxu0 0.0
    %2098 = vmatprep.subr.mxu0 0.0
    %2099 = vmatpush2.msra.mxu0 0.0
    %2100 = vmatprep.subr.mxu0 0.0
    %2101 = vmatpush2.msra.mxu0 0.0
    %2102 = vmatprep.subr.mxu0 0.0
    %2103 = vmatpush2.msra.mxu0 0.0
    %2104 = vmatprep.subr.mxu0 0.0
    %2105 = vmatpush2.msra.mxu0 0.0
    %2106 = vmatprep.subr.mxu0 0.0
    %2107 = vmatpush2.msra.mxu0 0.0
    %2108 = vmatprep.subr.mxu0 0.0
    %2109 = vmatpush2.msra.mxu0 0.0
    %2110 = vmatprep.subr.mxu0 0.0
    %2111 = vmatpush2.msra.mxu0 0.0
    %2112 = vmatprep.subr.mxu0 0.0
    %2113 = vmatpush2.msra.mxu0 0.0
    %2114 = vmatprep.subr.mxu0 0.0
    %2115 = vmatpush2.msra.mxu0 0.0
    %2116 = vmatprep.subr.mxu0 0.0
    %2117 = vmatpush2.msra.mxu0 0.0
    %2118 = vmatprep.subr.mxu0 0.0
    %2119 = vmatpush2.msra.mxu0 0.0
    %2120 = vmatprep.subr.mxu0 0.0
    %2121 = vmatpush2.msra.mxu0 0.0
    %2122 = vmatprep.mubr.f32.mxu0 0.0
    %2123 = vmatmul.mubr.f32.gmra.mxu0 %v2056
    %v2124 = vpop.f32.mrf.mxu0
    %v2125 = vadd.f32 %v2053, %v2124
    %v2126 = vpop.f32.mrf.mxu0
    %2127 = vdwg.mxu0
    %vm2128 = vcmask 15360
    %v2129 = vsel %vm2128, %v2125, -inf
    %2130 = vmax.xlane.f32.xlu0 %v2129
    %v2131 = vpop.xlane.xlu0 %2130
    %v2132 = vsub.f32 %v2125, %v2131
    %v2133 = vmul.f32 %v2132, 1.442695
    %v2134 = vpow.pop %v2133
    %v2135 = vsel %vm2128, %v2134, 0.0
    %2136 = vadd.xlane.f32.xlu0 %v2135
    %v2137 = vpop.xlane.xlu0 %2136
    %v2138 = vlog2.pop %v2137
    %v2139 = vmul.f32 %v2138, 0.6931472
    %v2140 = vsub.f32 %v2132, %v2139
    %2141 = vst.msk [vmem:[%s8] sm:$0xff] %vm2128, %v2140
    // Predicated region
    $region38: #{tpu_custom_call.1} parent=1 // pred_check
      _
    $region39: #{tpu_custom_call.1} parent=1 // pred_check_branch
      %2143 = sbr.rel (0) target = $region41
    $region40: #{tpu_custom_call.1} parent=1 // pred_region
      _
    $region41: #{tpu_custom_call.1} parent=1 // pred_fallthru
      _
    // Predicated region
    $region42: #{tpu_custom_call.1} parent=1 // pred_check
      _
    $region43: #{tpu_custom_call.1} parent=1 // pred_check_branch
      %2145 = sbr.rel (0) target = $region45
    $region44: #{tpu_custom_call.1} parent=1 // pred_region
      _
    $region45: #{tpu_custom_call.1} parent=1 // pred_fallthru
      _
    %2146 = vsyncpa [#allocation3], 1

</llo_original>
